<compile_context>
chip_gen: v5e
topology: v5e:2x2
jax: 0.10.0
libtpu: 0.0.40
codegen_flags: <defaults>
</compile_context>

<pallas_src>
import math
import functools

import jax
import jax.numpy as jnp
from jax.experimental import pallas as pl
from jax.experimental.pallas import tpu as pltpu


_SMEM_SPEC = pl.BlockSpec(memory_space=pltpu.MemorySpace.SMEM)
_VMEM_LIMIT = 48 * 1024 * 1024   # headroom over 16/32 MiB scoped defaults, < v7x physical


def _round_up(x, m):
    return ((x + m - 1) // m) * m


# ----------------------------- Pallas kernels ------------------------------ #

def model_kernel(*refs, has_cond: bool):
    """Fused corrupt (q-sampler) + synthetic linear denoiser.

    noisy = sr*emb + nr*noise
    out   = noisy @ W1 (+ cond @ W2) + b + time * w_time

    sr/nr/time: (B,) f32 SMEM; emb/noise/cond: (1, tL, E) bf16 VMEM blocks;
    W1/W2: (E, E) bf16 resident; b/w_time: (1, E) f32; out: (1, tL, E) f32.
    """
    if has_cond:
        (sr_ref, nr_ref, time_ref, emb_ref, noise_ref, cond_ref,
         w1_ref, w2_ref, b_ref, wt_ref, out_ref) = refs
    else:
        (sr_ref, nr_ref, time_ref, emb_ref, noise_ref,
         w1_ref, b_ref, wt_ref, out_ref) = refs

    bb = pl.program_id(0)
    sr = sr_ref[bb]                                   # per-batch scalars (SMEM)
    nr = nr_ref[bb]
    t = time_ref[bb]

    # Corruption mixed in f32 from bf16 streams, fed to the MXU in bf16.
    noisy = (sr * emb_ref[0].astype(jnp.float32)
             + nr * noise_ref[0].astype(jnp.float32)).astype(jnp.bfloat16)

    h = jnp.dot(noisy, w1_ref[...], preferred_element_type=jnp.float32)
    if has_cond:
        h = h + jnp.dot(cond_ref[0], w2_ref[...],
                        preferred_element_type=jnp.float32)
    out_ref[0] = h + b_ref[...] + t * wt_ref[...]     # (tL, E) f32


def lse_kernel(pred_ref, ematT_ref, lse_ref, m_sc, l_sc, *, v_valid, pad_v):
    """Streaming unembed + online logsumexp.

    Grid = (row tiles, vocab tiles); vocab is the trailing reduction axis.
    pred: (tR, E) bf16; ematT: (E, tV) bf16; lse: (tR, 1) f32 per row.
    """
    j = pl.program_id(1)
    nj = pl.num_programs(1)

    @pl.when(j == 0)
    def _():
        m_sc[...] = jnp.full(m_sc.shape, -jnp.inf, dtype=jnp.float32)
        l_sc[...] = jnp.zeros(l_sc.shape, dtype=jnp.float32)

    logits = jnp.dot(pred_ref[...], ematT_ref[...],
                     preferred_element_type=jnp.float32)          # (tR, tV)
    tR, tV = logits.shape

    if pad_v:  # static: vocab was padded to a tile multiple -> mask the tail
        col = jax.lax.broadcasted_iota(jnp.int32, (tR, tV), 1) + j * tV
        logits = jnp.where(col < v_valid, logits, -jnp.inf)

    # Online logsumexp.
    m_prev = m_sc[...]
    m_new = jnp.maximum(m_prev, jnp.max(logits, axis=-1, keepdims=True))
    l_sc[...] = (jnp.exp(m_prev - m_new) * l_sc[...]
                 + jnp.sum(jnp.exp(logits - m_new), axis=-1, keepdims=True))
    m_sc[...] = m_new

    @pl.when(j == nj - 1)
    def _():
        lse_ref[...] = m_sc[...] + jnp.log(l_sc[...])


# ------------------------------ JAX wrappers ------------------------------- #

def model_apply(emb_bf16, noise_bf16, cond_bf16, signal_rate, noise_rate, time,
                w1, w2, bias, w_time, *, has_cond, seq_tile=512):
    """Fused corrupt + denoiser. emb/noise/cond are bf16; output f32."""
    B, L, E = emb_bf16.shape
    tL = min(seq_tile, L)
    if L % tL:
        tL = L   # TODO(synk): pad the sequence instead for odd lengths

    act_spec = pl.BlockSpec((1, tL, E), lambda bb, ll: (bb, ll, 0))
    # Resident constants (constant index_map => fetched once).
    # TODO(synk): pipeline_mode=pl.Buffered(1) here would single-buffer the
    # (E,E) weights and halve their VMEM footprint (matters on v7x's 64 MiB).
    mat_spec = pl.BlockSpec((E, E), lambda bb, ll: (0, 0))
    row_spec = pl.BlockSpec((1, E), lambda bb, ll: (0, 0))

    w1b = w1.astype(jnp.bfloat16)
    bias2 = bias.reshape(1, E)
    wt2 = w_time.reshape(1, E)

    if has_cond:
        in_specs = [_SMEM_SPEC, _SMEM_SPEC, _SMEM_SPEC,
                    act_spec, act_spec, act_spec,
                    mat_spec, mat_spec, row_spec, row_spec]
        args = (signal_rate, noise_rate, time, emb_bf16, noise_bf16, cond_bf16,
                w1b, w2.astype(jnp.bfloat16), bias2, wt2)
    else:
        in_specs = [_SMEM_SPEC, _SMEM_SPEC, _SMEM_SPEC,
                    act_spec, act_spec, mat_spec, row_spec, row_spec]
        args = (signal_rate, noise_rate, time, emb_bf16, noise_bf16,
                w1b, bias2, wt2)

    return pl.pallas_call(
        functools.partial(model_kernel, has_cond=has_cond),
        out_shape=jax.ShapeDtypeStruct((B, L, E), jnp.float32),
        grid=(B, L // tL),
        in_specs=in_specs,
        out_specs=act_spec,
        compiler_params=pltpu.CompilerParams(
            dimension_semantics=("parallel", "parallel"),
            vmem_limit_bytes=_VMEM_LIMIT),
    )(*args)


def losses(pred_embeds, embeds, targets, embed_mat, z_loss=0.0,
           r_tile=512, v_tile=2048):
    """MSE (plain JAX) + cross-entropy via the streaming-logsumexp kernel."""
    B, L, E = pred_embeds.shape
    V = embed_mat.shape[0]
    R = B * L

    # MSE over all elements, f32, in plain JAX (emb stream dropped from kernel).
    loss_mse = jnp.mean(jnp.square(pred_embeds - embeds))

    # bf16 pred streamed into the kernel; cast once here.
    pred_bf16 = pred_embeds.reshape(R, E).astype(jnp.bfloat16)

    # Target logit computed once per row outside the vocab loop:
    # ce = logsumexp(logits) - <pred, embed_mat[target]>.
    tgt_rows = jnp.take(embed_mat, targets.reshape(-1), axis=0).astype(jnp.bfloat16)
    tgt_logit = jnp.sum(pred_bf16.astype(jnp.float32)
                        * tgt_rows.astype(jnp.float32), axis=-1)        # (R,)

    # Tiling with padding (keep tile edges MXU-aligned; no full-size fallback).
    tR = _round_up(min(r_tile, R), 8)
    Rp = _round_up(R, tR)
    tV = _round_up(min(v_tile, V), 128)
    Vp = _round_up(V, tV)
    pad_v = Vp != V

    # Pre-transposed bf16 unembed matrix streamed in (E, tV) blocks.
    ematT = embed_mat.T.astype(jnp.bfloat16)                    # (E, V)
    if pad_v:
        ematT = jnp.pad(ematT, ((0, 0), (0, Vp - V)))
    pred_in = pred_bf16
    if Rp != R:
        pred_in = jnp.pad(pred_bf16, ((0, Rp - R), (0, 0)))

    lse_rows = pl.pallas_call(
        functools.partial(lse_kernel, v_valid=V, pad_v=pad_v),
        out_shape=jax.ShapeDtypeStruct((Rp, 1), jnp.float32),
        grid=(Rp // tR, Vp // tV),
        in_specs=[
            pl.BlockSpec((tR, E), lambda i, j: (i, 0)),
            pl.BlockSpec((E, tV), lambda i, j: (0, j)),
        ],
        out_specs=pl.BlockSpec((tR, 1), lambda i, j: (i, 0)),
        scratch_shapes=[pltpu.VMEM((tR, 1), jnp.float32),    # running max
                        pltpu.VMEM((tR, 1), jnp.float32)],   # running sum
        compiler_params=pltpu.CompilerParams(
            dimension_semantics=("parallel", "arbitrary"),
            vmem_limit_bytes=_VMEM_LIMIT),
    )(pred_in, ematT)

    lse = lse_rows[:R, 0]                                       # drop padded rows
    ce = lse - tgt_logit
    if z_loss:
        ce = ce + z_loss * jnp.square(lse)
    loss_recon = jnp.mean(ce)
    return loss_mse, loss_recon


# ------------------------------ TextSed forward ----------------------------- #

def cosine_alpha_bar(time, offset=0.0002):
    return jnp.cos((time + offset) / (1.0 + offset) * (math.pi / 2.0)) ** 2


def text_sed_forward(tokens, embed_mat, params, key, use_self_cond=True,
                     z_loss=0.0, seq_tile=512, loss_r_tile=512,
                     loss_v_tile=2048):
    """Mirrors TextSed.forward. tokens: (B, L) int32. jit-safe."""
    B, L = tokens.shape
    V, E = embed_mat.shape
    embed_scale = E ** -0.5

    k_time, k_noise, k_coin = jax.random.split(key, 3)

    # reader.embed (gather is glue); f32 copy kept for the MSE target.
    embeds = embed_scale * jnp.take(embed_mat, tokens, axis=0)      # (B, L, E)

    # forward diffusion schedule scalars (per batch element).
    time = jax.random.uniform(k_time, (B,), dtype=jnp.float32)
    abar = cosine_alpha_bar(time)
    signal_rate = jnp.sqrt(abar)                                    # (B,)
    noise_rate = jnp.sqrt(1.0 - abar)                               # (B,)

    # bf16 activation streams into the fused corrupt+denoise kernel.
    emb_bf16 = embeds.astype(jnp.bfloat16)
    noise_bf16 = jax.random.normal(k_noise, embeds.shape, dtype=jnp.bfloat16)

    W, bias, w_time = params
    W1, W2 = W[:E], W[E:]       # split concat([noisy, cond]) @ W into two dots

    def run_model(cond_bf16):
        has_cond = cond_bf16 is not None
        return model_apply(emb_bf16, noise_bf16, cond_bf16,
                           signal_rate, noise_rate, time,
                           W1, W2 if has_cond else None, bias, w_time,
                           has_cond=has_cond, seq_tile=seq_tile)

    if use_self_cond:
        coin = jax.random.uniform(k_coin, ()) > 0.5

        def heads():
            # self-conditioning pass (no_grad in reference -> stop_gradient)
            cond = jax.lax.stop_gradient(run_model(None)).astype(jnp.bfloat16)
            return run_model(cond)

        def tails():
            # cond == 0 => W2 term vanishes: skip the cond DMA + second dot.
            return run_model(None)

        pred_embeds = jax.lax.cond(coin, heads, tails)
    else:
        pred_embeds = run_model(None)

    # reader.unembed + losses.
    loss_mse, loss_recon = losses(pred_embeds, embeds, tokens, embed_mat,
                                  z_loss=z_loss, r_tile=loss_r_tile,
                                  v_tile=loss_v_tile)
    loss = loss_mse + loss_recon
    metrics = {"total_loss": loss, "loss_mse": loss_mse,
               "loss_recon": loss_recon}
    return loss, metrics


# ----------------------------------- main ----------------------------------- #

if __name__ == "__main__":
    # Toy config. V = 320 is deliberately not a multiple of the vocab tile so
    # the pad+mask path of the loss kernel is exercised; E is lane-aligned.
    B, L, E, V = 2, 8, 128, 320

    key = jax.random.PRNGKey(0)
    k_emb, k_w, k_b, k_wt, k_tok, k_fwd = jax.random.split(key, 6)

    # deterministic synthetic parameters
    embed_mat = 0.02 * jax.random.normal(k_emb, (V, E), dtype=jnp.float32)
    W = (1.0 / math.sqrt(2 * E)) * jax.random.normal(k_w, (2 * E, E), jnp.float32)
    b = 0.01 * jax.random.normal(k_b, (1, E), jnp.float32)
    w_time = 0.1 * jax.random.normal(k_wt, (E,), jnp.float32)
    params = (W, b, w_time)

    tokens = jax.random.randint(k_tok, (B, L), 0, V, dtype=jnp.int32)

    # Toy tile sizes exercise row tiling, vocab tiling AND vocab padding; at
    # real sizes the defaults (rows 512, vocab 2048) keep the loss kernel
    # MXU-bound and within VMEM on all generations.
    fwd = jax.jit(functools.partial(
        text_sed_forward, use_self_cond=True, z_loss=0.0,
        seq_tile=8, loss_r_tile=8, loss_v_tile=128))

    loss, metrics = fwd(tokens, embed_mat, params, k_fwd)
    loss = jax.block_until_ready(loss)
    for v in metrics.values():
        jax.block_until_ready(v)

    assert jnp.isfinite(loss)
    print("KERNEL_OK")
</pallas_src>

<mosaic_0001>
module attributes {stable_mosaic.version = 11 : i64} {
  func.func @model_kernel(%arg0: i32, %arg1: i32, %arg2: memref<2xf32, #tpu.memory_space<smem>>, %arg3: memref<2xf32, #tpu.memory_space<smem>>, %arg4: memref<2xf32, #tpu.memory_space<smem>>, %arg5: memref<1x8x128xbf16, #tpu.memory_space<vmem>>, %arg6: memref<1x8x128xbf16, #tpu.memory_space<vmem>>, %arg7: memref<128x128xbf16, #tpu.memory_space<vmem>>, %arg8: memref<1x128xf32, #tpu.memory_space<vmem>>, %arg9: memref<1x128xf32, #tpu.memory_space<vmem>>, %arg10: memref<1x8x128xf32, #tpu.memory_space<vmem>>) attributes {dimension_semantics = [#tpu.dimension_semantics<parallel>, #tpu.dimension_semantics<parallel>], iteration_bounds = array<i64: 2, 1>, scalar_prefetch = 0 : i64, scratch_operands = 0 : i64, tpu.core_type = #tpu.core_type<tc>, window_params = [{transform_indices = @transform_0, window_bounds = array<i64: 2>}, {transform_indices = @transform_1, window_bounds = array<i64: 2>}, {transform_indices = @transform_2, window_bounds = array<i64: 2>}, {transform_indices = @transform_3, window_bounds = array<i64: 1, 8, 128>}, {transform_indices = @transform_4, window_bounds = array<i64: 1, 8, 128>}, {pipeline_mode = #tpu.pipeline_mode<synchronous>, transform_indices = @transform_5, window_bounds = array<i64: 128, 128>}, {pipeline_mode = #tpu.pipeline_mode<synchronous>, transform_indices = @transform_6, window_bounds = array<i64: 1, 128>}, {pipeline_mode = #tpu.pipeline_mode<synchronous>, transform_indices = @transform_7, window_bounds = array<i64: 1, 128>}, {transform_indices = @transform_8, window_bounds = array<i64: 1, 8, 128>}]} {
    %0 = arith.index_cast %arg0 : i32 to index
    %1 = memref.load %arg2[%0] : memref<2xf32, #tpu.memory_space<smem>>
    %2 = arith.index_cast %arg0 : i32 to index
    %3 = memref.load %arg3[%2] : memref<2xf32, #tpu.memory_space<smem>>
    %4 = arith.index_cast %arg0 : i32 to index
    %5 = memref.load %arg4[%4] : memref<2xf32, #tpu.memory_space<smem>>
    %c0 = arith.constant 0 : index
    %c0_0 = arith.constant 0 : index
    %c0_1 = arith.constant 0 : index
    %6 = vector.load %arg5[%c0, %c0_0, %c0_1] : memref<1x8x128xbf16, #tpu.memory_space<vmem>>, vector<1x8x128xbf16>
    %7 = vector.shape_cast %6 : vector<1x8x128xbf16> to vector<8x128xbf16>
    %8 = arith.extf %7 : vector<8x128xbf16> to vector<8x128xf32>
    %9 = vector.broadcast %1 : f32 to vector<8x128xf32>
    %10 = arith.mulf %9, %8 : vector<8x128xf32>
    %c0_2 = arith.constant 0 : index
    %c0_3 = arith.constant 0 : index
    %c0_4 = arith.constant 0 : index
    %11 = vector.load %arg6[%c0_2, %c0_3, %c0_4] : memref<1x8x128xbf16, #tpu.memory_space<vmem>>, vector<1x8x128xbf16>
    %12 = vector.shape_cast %11 : vector<1x8x128xbf16> to vector<8x128xbf16>
    %13 = arith.extf %12 : vector<8x128xbf16> to vector<8x128xf32>
    %14 = vector.broadcast %3 : f32 to vector<8x128xf32>
    %15 = arith.mulf %14, %13 : vector<8x128xf32>
    %16 = arith.addf %10, %15 : vector<8x128xf32>
    %17 = arith.truncf %16 : vector<8x128xf32> to vector<8x128xbf16>
    %c0_5 = arith.constant 0 : index
    %c0_6 = arith.constant 0 : index
    %18 = vector.load %arg7[%c0_5, %c0_6] : memref<128x128xbf16, #tpu.memory_space<vmem>>, vector<128x128xbf16>
    %cst = arith.constant dense<0.000000e+00> : vector<8x128xf32>
    %19 = tpu.matmul %17, %18, %cst {dimension_numbers = #tpu.dot_dimension_numbers<[1], [0], [0], [1], [0, 0, 1, 1], [], []>} : vector<8x128xbf16>, vector<128x128xbf16>, vector<8x128xf32> -> vector<8x128xf32>
    %c0_7 = arith.constant 0 : index
    %c0_8 = arith.constant 0 : index
    %20 = vector.load %arg8[%c0_7, %c0_8] : memref<1x128xf32, #tpu.memory_space<vmem>>, vector<1x128xf32>
    %21 = vector.broadcast %20 : vector<1x128xf32> to vector<8x128xf32>
    %22 = arith.addf %19, %21 : vector<8x128xf32>
    %c0_9 = arith.constant 0 : index
    %c0_10 = arith.constant 0 : index
    %23 = vector.load %arg9[%c0_9, %c0_10] : memref<1x128xf32, #tpu.memory_space<vmem>>, vector<1x128xf32>
    %24 = vector.broadcast %5 : f32 to vector<1x128xf32>
    %25 = arith.mulf %24, %23 : vector<1x128xf32>
    %26 = vector.broadcast %25 : vector<1x128xf32> to vector<8x128xf32>
    %27 = arith.addf %22, %26 : vector<8x128xf32>
    %c0_11 = arith.constant 0 : index
    %c0_12 = arith.constant 0 : index
    %c0_13 = arith.constant 0 : index
    %28 = vector.load %arg10[%c0_11, %c0_12, %c0_13] : memref<1x8x128xf32, #tpu.memory_space<vmem>>, vector<1x8x128xf32>
    %29 = vector.shape_cast %28 : vector<1x8x128xf32> to vector<8x128xf32>
    %30 = vector.shape_cast %27 : vector<8x128xf32> to vector<1x8x128xf32>
    tpu.vector_store %arg10[%c0_11, %c0_12, %c0_13], %30 {strides = array<i32>} : memref<1x8x128xf32, #tpu.memory_space<vmem>>, vector<1x8x128xf32>,
    return
  }
  func.func @transform_0(%arg0: i32, %arg1: i32) -> i32 {
    %c0_i32 = arith.constant 0 : i32
    %c0_i32_0 = arith.constant 0 : i32
    return %c0_i32 : i32
  }
  func.func @transform_1(%arg0: i32, %arg1: i32) -> i32 {
    %c0_i32 = arith.constant 0 : i32
    %c0_i32_0 = arith.constant 0 : i32
    return %c0_i32 : i32
  }
  func.func @transform_2(%arg0: i32, %arg1: i32) -> i32 {
    %c0_i32 = arith.constant 0 : i32
    %c0_i32_0 = arith.constant 0 : i32
    return %c0_i32 : i32
  }
  func.func @transform_3(%arg0: i32, %arg1: i32) -> (i32, i32, i32) {
    %c0_i32 = arith.constant 0 : i32
    %c0_i32_0 = arith.constant 0 : i32
    return %arg0, %arg1, %c0_i32 : i32, i32, i32
  }
  func.func @transform_4(%arg0: i32, %arg1: i32) -> (i32, i32, i32) {
    %c0_i32 = arith.constant 0 : i32
    %c0_i32_0 = arith.constant 0 : i32
    return %arg0, %arg1, %c0_i32 : i32, i32, i32
  }
  func.func @transform_5(%arg0: i32, %arg1: i32) -> (i32, i32) {
    %c0_i32 = arith.constant 0 : i32
    %c0_i32_0 = arith.constant 0 : i32
    %c0_i32_1 = arith.constant 0 : i32
    return %c0_i32, %c0_i32_0 : i32, i32
  }
  func.func @transform_6(%arg0: i32, %arg1: i32) -> (i32, i32) {
    %c0_i32 = arith.constant 0 : i32
    %c0_i32_0 = arith.constant 0 : i32
    %c0_i32_1 = arith.constant 0 : i32
    return %c0_i32, %c0_i32_0 : i32, i32
  }
  func.func @transform_7(%arg0: i32, %arg1: i32) -> (i32, i32) {
    %c0_i32 = arith.constant 0 : i32
    %c0_i32_0 = arith.constant 0 : i32
    %c0_i32_1 = arith.constant 0 : i32
    return %c0_i32, %c0_i32_0 : i32, i32
  }
  func.func @transform_8(%arg0: i32, %arg1: i32) -> (i32, i32, i32) {
    %c0_i32 = arith.constant 0 : i32
    %c0_i32_0 = arith.constant 0 : i32
    return %arg0, %arg1, %c0_i32 : i32, i32, i32
  }
}

module attributes {stable_mosaic.version = 11 : i64} {
  func.func @model_kernel(%arg0: i32, %arg1: i32, %arg2: memref<2xf32, #tpu.memory_space<smem>>, %arg3: memref<2xf32, #tpu.memory_space<smem>>, %arg4: memref<2xf32, #tpu.memory_space<smem>>, %arg5: memref<1x8x128xbf16, #tpu.memory_space<vmem>>, %arg6: memref<1x8x128xbf16, #tpu.memory_space<vmem>>, %arg7: memref<128x128xbf16, #tpu.memory_space<vmem>>, %arg8: memref<1x128xf32, #tpu.memory_space<vmem>>, %arg9: memref<1x128xf32, #tpu.memory_space<vmem>>, %arg10: memref<1x8x128xf32, #tpu.memory_space<vmem>>) attributes {dimension_semantics = [#tpu.dimension_semantics<parallel>, #tpu.dimension_semantics<parallel>], iteration_bounds = array<i64: 2, 1>, scalar_prefetch = 0 : i64, scratch_operands = 0 : i64, tpu.core_type = #tpu.core_type<tc>, window_params = [{transform_indices = @transform_0, window_bounds = array<i64: 2>}, {transform_indices = @transform_1, window_bounds = array<i64: 2>}, {transform_indices = @transform_2, window_bounds = array<i64: 2>}, {transform_indices = @transform_3, window_bounds = array<i64: 1, 8, 128>}, {transform_indices = @transform_4, window_bounds = array<i64: 1, 8, 128>}, {pipeline_mode = #tpu.pipeline_mode<synchronous>, transform_indices = @transform_5, window_bounds = array<i64: 128, 128>}, {pipeline_mode = #tpu.pipeline_mode<synchronous>, transform_indices = @transform_6, window_bounds = array<i64: 1, 128>}, {pipeline_mode = #tpu.pipeline_mode<synchronous>, transform_indices = @transform_7, window_bounds = array<i64: 1, 128>}, {transform_indices = @transform_8, window_bounds = array<i64: 1, 8, 128>}]} {
    %0 = arith.index_cast %arg0 : i32 to index
    %1 = memref.load %arg2[%0] : memref<2xf32, #tpu.memory_space<smem>>
    %2 = arith.index_cast %arg0 : i32 to index
    %3 = memref.load %arg3[%2] : memref<2xf32, #tpu.memory_space<smem>>
    %4 = arith.index_cast %arg0 : i32 to index
    %5 = memref.load %arg4[%4] : memref<2xf32, #tpu.memory_space<smem>>
    %c0 = arith.constant 0 : index
    %c0_0 = arith.constant 0 : index
    %c0_1 = arith.constant 0 : index
    %6 = vector.load %arg5[%c0, %c0_0, %c0_1] : memref<1x8x128xbf16, #tpu.memory_space<vmem>>, vector<1x8x128xbf16>
    %7 = vector.shape_cast %6 : vector<1x8x128xbf16> to vector<8x128xbf16>
    %8 = arith.extf %7 : vector<8x128xbf16> to vector<8x128xf32>
    %9 = vector.broadcast %1 : f32 to vector<8x128xf32>
    %10 = arith.mulf %9, %8 : vector<8x128xf32>
    %c0_2 = arith.constant 0 : index
    %c0_3 = arith.constant 0 : index
    %c0_4 = arith.constant 0 : index
    %11 = vector.load %arg6[%c0_2, %c0_3, %c0_4] : memref<1x8x128xbf16, #tpu.memory_space<vmem>>, vector<1x8x128xbf16>
    %12 = vector.shape_cast %11 : vector<1x8x128xbf16> to vector<8x128xbf16>
    %13 = arith.extf %12 : vector<8x128xbf16> to vector<8x128xf32>
    %14 = vector.broadcast %3 : f32 to vector<8x128xf32>
    %15 = arith.mulf %14, %13 : vector<8x128xf32>
    %16 = arith.addf %10, %15 : vector<8x128xf32>
    %17 = arith.truncf %16 : vector<8x128xf32> to vector<8x128xbf16>
    %c0_5 = arith.constant 0 : index
    %c0_6 = arith.constant 0 : index
    %18 = vector.load %arg7[%c0_5, %c0_6] : memref<128x128xbf16, #tpu.memory_space<vmem>>, vector<128x128xbf16>
    %cst = arith.constant dense<0.000000e+00> : vector<8x128xf32>
    %19 = tpu.matmul %17, %18, %cst {dimension_numbers = #tpu.dot_dimension_numbers<[1], [0], [0], [1], [0, 0, 1, 1], [], []>} : vector<8x128xbf16>, vector<128x128xbf16>, vector<8x128xf32> -> vector<8x128xf32>
    %c0_7 = arith.constant 0 : index
    %c0_8 = arith.constant 0 : index
    %20 = vector.load %arg8[%c0_7, %c0_8] : memref<1x128xf32, #tpu.memory_space<vmem>>, vector<1x128xf32>
    %21 = vector.broadcast %20 : vector<1x128xf32> to vector<8x128xf32>
    %22 = arith.addf %19, %21 : vector<8x128xf32>
    %c0_9 = arith.constant 0 : index
    %c0_10 = arith.constant 0 : index
    %23 = vector.load %arg9[%c0_9, %c0_10] : memref<1x128xf32, #tpu.memory_space<vmem>>, vector<1x128xf32>
    %24 = vector.broadcast %5 : f32 to vector<1x128xf32>
    %25 = arith.mulf %24, %23 : vector<1x128xf32>
    %26 = vector.broadcast %25 : vector<1x128xf32> to vector<8x128xf32>
    %27 = arith.addf %22, %26 : vector<8x128xf32>
    %c0_11 = arith.constant 0 : index
    %c0_12 = arith.constant 0 : index
    %c0_13 = arith.constant 0 : index
    %28 = vector.load %arg10[%c0_11, %c0_12, %c0_13] : memref<1x8x128xf32, #tpu.memory_space<vmem>>, vector<1x8x128xf32>
    %29 = vector.shape_cast %28 : vector<1x8x128xf32> to vector<8x128xf32>
    %30 = vector.shape_cast %27 : vector<8x128xf32> to vector<1x8x128xf32>
    tpu.vector_store %arg10[%c0_11, %c0_12, %c0_13], %30 {strides = array<i32>} : memref<1x8x128xf32, #tpu.memory_space<vmem>>, vector<1x8x128xf32>,
    return
  }
  func.func @transform_0(%arg0: i32, %arg1: i32) -> i32 {
    %c0_i32 = arith.constant 0 : i32
    %c0_i32_0 = arith.constant 0 : i32
    return %c0_i32 : i32
  }
  func.func @transform_1(%arg0: i32, %arg1: i32) -> i32 {
    %c0_i32 = arith.constant 0 : i32
    %c0_i32_0 = arith.constant 0 : i32
    return %c0_i32 : i32
  }
  func.func @transform_2(%arg0: i32, %arg1: i32) -> i32 {
    %c0_i32 = arith.constant 0 : i32
    %c0_i32_0 = arith.constant 0 : i32
    return %c0_i32 : i32
  }
  func.func @transform_3(%arg0: i32, %arg1: i32) -> (i32, i32, i32) {
    %c0_i32 = arith.constant 0 : i32
    %c0_i32_0 = arith.constant 0 : i32
    return %arg0, %arg1, %c0_i32 : i32, i32, i32
  }
  func.func @transform_4(%arg0: i32, %arg1: i32) -> (i32, i32, i32) {
    %c0_i32 = arith.constant 0 : i32
    %c0_i32_0 = arith.constant 0 : i32
    return %arg0, %arg1, %c0_i32 : i32, i32, i32
  }
  func.func @transform_5(%arg0: i32, %arg1: i32) -> (i32, i32) {
    %c0_i32 = arith.constant 0 : i32
    %c0_i32_0 = arith.constant 0 : i32
    %c0_i32_1 = arith.constant 0 : i32
    return %c0_i32, %c0_i32_0 : i32, i32
  }
  func.func @transform_6(%arg0: i32, %arg1: i32) -> (i32, i32) {
    %c0_i32 = arith.constant 0 : i32
    %c0_i32_0 = arith.constant 0 : i32
    %c0_i32_1 = arith.constant 0 : i32
    return %c0_i32, %c0_i32_0 : i32, i32
  }
  func.func @transform_7(%arg0: i32, %arg1: i32) -> (i32, i32) {
    %c0_i32 = arith.constant 0 : i32
    %c0_i32_0 = arith.constant 0 : i32
    %c0_i32_1 = arith.constant 0 : i32
    return %c0_i32, %c0_i32_0 : i32, i32
  }
  func.func @transform_8(%arg0: i32, %arg1: i32) -> (i32, i32, i32) {
    %c0_i32 = arith.constant 0 : i32
    %c0_i32_0 = arith.constant 0 : i32
    return %arg0, %arg1, %c0_i32 : i32, i32, i32
  }
}

module attributes {stable_mosaic.version = 11 : i64} {
  func.func @model_kernel(%arg0: i32, %arg1: i32, %arg2: memref<2xf32, #tpu.memory_space<smem>>, %arg3: memref<2xf32, #tpu.memory_space<smem>>, %arg4: memref<2xf32, #tpu.memory_space<smem>>, %arg5: memref<1x8x128xbf16, #tpu.memory_space<vmem>>, %arg6: memref<1x8x128xbf16, #tpu.memory_space<vmem>>, %arg7: memref<1x8x128xbf16, #tpu.memory_space<vmem>>, %arg8: memref<128x128xbf16, #tpu.memory_space<vmem>>, %arg9: memref<128x128xbf16, #tpu.memory_space<vmem>>, %arg10: memref<1x128xf32, #tpu.memory_space<vmem>>, %arg11: memref<1x128xf32, #tpu.memory_space<vmem>>, %arg12: memref<1x8x128xf32, #tpu.memory_space<vmem>>) attributes {dimension_semantics = [#tpu.dimension_semantics<parallel>, #tpu.dimension_semantics<parallel>], iteration_bounds = array<i64: 2, 1>, scalar_prefetch = 0 : i64, scratch_operands = 0 : i64, tpu.core_type = #tpu.core_type<tc>, window_params = [{transform_indices = @transform_0, window_bounds = array<i64: 2>}, {transform_indices = @transform_1, window_bounds = array<i64: 2>}, {transform_indices = @transform_2, window_bounds = array<i64: 2>}, {transform_indices = @transform_3, window_bounds = array<i64: 1, 8, 128>}, {transform_indices = @transform_4, window_bounds = array<i64: 1, 8, 128>}, {transform_indices = @transform_5, window_bounds = array<i64: 1, 8, 128>}, {pipeline_mode = #tpu.pipeline_mode<synchronous>, transform_indices = @transform_6, window_bounds = array<i64: 128, 128>}, {pipeline_mode = #tpu.pipeline_mode<synchronous>, transform_indices = @transform_7, window_bounds = array<i64: 128, 128>}, {pipeline_mode = #tpu.pipeline_mode<synchronous>, transform_indices = @transform_8, window_bounds = array<i64: 1, 128>}, {pipeline_mode = #tpu.pipeline_mode<synchronous>, transform_indices = @transform_9, window_bounds = array<i64: 1, 128>}, {transform_indices = @transform_10, window_bounds = array<i64: 1, 8, 128>}]} {
    %0 = arith.index_cast %arg0 : i32 to index
    %1 = memref.load %arg2[%0] : memref<2xf32, #tpu.memory_space<smem>>
    %2 = arith.index_cast %arg0 : i32 to index
    %3 = memref.load %arg3[%2] : memref<2xf32, #tpu.memory_space<smem>>
    %4 = arith.index_cast %arg0 : i32 to index
    %5 = memref.load %arg4[%4] : memref<2xf32, #tpu.memory_space<smem>>
    %c0 = arith.constant 0 : index
    %c0_0 = arith.constant 0 : index
    %c0_1 = arith.constant 0 : index
    %6 = vector.load %arg5[%c0, %c0_0, %c0_1] : memref<1x8x128xbf16, #tpu.memory_space<vmem>>, vector<1x8x128xbf16>
    %7 = vector.shape_cast %6 : vector<1x8x128xbf16> to vector<8x128xbf16>
    %8 = arith.extf %7 : vector<8x128xbf16> to vector<8x128xf32>
    %9 = vector.broadcast %1 : f32 to vector<8x128xf32>
    %10 = arith.mulf %9, %8 : vector<8x128xf32>
    %c0_2 = arith.constant 0 : index
    %c0_3 = arith.constant 0 : index
    %c0_4 = arith.constant 0 : index
    %11 = vector.load %arg6[%c0_2, %c0_3, %c0_4] : memref<1x8x128xbf16, #tpu.memory_space<vmem>>, vector<1x8x128xbf16>
    %12 = vector.shape_cast %11 : vector<1x8x128xbf16> to vector<8x128xbf16>
    %13 = arith.extf %12 : vector<8x128xbf16> to vector<8x128xf32>
    %14 = vector.broadcast %3 : f32 to vector<8x128xf32>
    %15 = arith.mulf %14, %13 : vector<8x128xf32>
    %16 = arith.addf %10, %15 : vector<8x128xf32>
    %17 = arith.truncf %16 : vector<8x128xf32> to vector<8x128xbf16>
    %c0_5 = arith.constant 0 : index
    %c0_6 = arith.constant 0 : index
    %18 = vector.load %arg8[%c0_5, %c0_6] : memref<128x128xbf16, #tpu.memory_space<vmem>>, vector<128x128xbf16>
    %cst = arith.constant dense<0.000000e+00> : vector<8x128xf32>
    %19 = tpu.matmul %17, %18, %cst {dimension_numbers = #tpu.dot_dimension_numbers<[1], [0], [0], [1], [0, 0, 1, 1], [], []>} : vector<8x128xbf16>, vector<128x128xbf16>, vector<8x128xf32> -> vector<8x128xf32>
    %c0_7 = arith.constant 0 : index
    %c0_8 = arith.constant 0 : index
    %c0_9 = arith.constant 0 : index
    %20 = vector.load %arg7[%c0_7, %c0_8, %c0_9] : memref<1x8x128xbf16, #tpu.memory_space<vmem>>, vector<1x8x128xbf16>
    %21 = vector.shape_cast %20 : vector<1x8x128xbf16> to vector<8x128xbf16>
    %c0_10 = arith.constant 0 : index
    %c0_11 = arith.constant 0 : index
    %22 = vector.load %arg9[%c0_10, %c0_11] : memref<128x128xbf16, #tpu.memory_space<vmem>>, vector<128x128xbf16>
    %cst_12 = arith.constant dense<0.000000e+00> : vector<8x128xf32>
    %23 = tpu.matmul %21, %22, %cst_12 {dimension_numbers = #tpu.dot_dimension_numbers<[1], [0], [0], [1], [0, 0, 1, 1], [], []>} : vector<8x128xbf16>, vector<128x128xbf16>, vector<8x128xf32> -> vector<8x128xf32>
    %24 = arith.addf %19, %23 : vector<8x128xf32>
    %c0_13 = arith.constant 0 : index
    %c0_14 = arith.constant 0 : index
    %25 = vector.load %arg10[%c0_13, %c0_14] : memref<1x128xf32, #tpu.memory_space<vmem>>, vector<1x128xf32>
    %26 = vector.broadcast %25 : vector<1x128xf32> to vector<8x128xf32>
    %27 = arith.addf %24, %26 : vector<8x128xf32>
    %c0_15 = arith.constant 0 : index
    %c0_16 = arith.constant 0 : index
    %28 = vector.load %arg11[%c0_15, %c0_16] : memref<1x128xf32, #tpu.memory_space<vmem>>, vector<1x128xf32>
    %29 = vector.broadcast %5 : f32 to vector<1x128xf32>
    %30 = arith.mulf %29, %28 : vector<1x128xf32>
    %31 = vector.broadcast %30 : vector<1x128xf32> to vector<8x128xf32>
    %32 = arith.addf %27, %31 : vector<8x128xf32>
    %c0_17 = arith.constant 0 : index
    %c0_18 = arith.constant 0 : index
    %c0_19 = arith.constant 0 : index
    %33 = vector.load %arg12[%c0_17, %c0_18, %c0_19] : memref<1x8x128xf32, #tpu.memory_space<vmem>>, vector<1x8x128xf32>
    %34 = vector.shape_cast %33 : vector<1x8x128xf32> to vector<8x128xf32>
    %35 = vector.shape_cast %32 : vector<8x128xf32> to vector<1x8x128xf32>
    tpu.vector_store %arg12[%c0_17, %c0_18, %c0_19], %35 {strides = array<i32>} : memref<1x8x128xf32, #tpu.memory_space<vmem>>, vector<1x8x128xf32>,
    return
  }
  func.func @transform_0(%arg0: i32, %arg1: i32) -> i32 {
    %c0_i32 = arith.constant 0 : i32
    %c0_i32_0 = arith.constant 0 : i32
    return %c0_i32 : i32
  }
  func.func @transform_1(%arg0: i32, %arg1: i32) -> i32 {
    %c0_i32 = arith.constant 0 : i32
    %c0_i32_0 = arith.constant 0 : i32
    return %c0_i32 : i32
  }
  func.func @transform_2(%arg0: i32, %arg1: i32) -> i32 {
    %c0_i32 = arith.constant 0 : i32
    %c0_i32_0 = arith.constant 0 : i32
    return %c0_i32 : i32
  }
  func.func @transform_3(%arg0: i32, %arg1: i32) -> (i32, i32, i32) {
    %c0_i32 = arith.constant 0 : i32
    %c0_i32_0 = arith.constant 0 : i32
    return %arg0, %arg1, %c0_i32 : i32, i32, i32
  }
  func.func @transform_4(%arg0: i32, %arg1: i32) -> (i32, i32, i32) {
    %c0_i32 = arith.constant 0 : i32
    %c0_i32_0 = arith.constant 0 : i32
    return %arg0, %arg1, %c0_i32 : i32, i32, i32
  }
  func.func @transform_5(%arg0: i32, %arg1: i32) -> (i32, i32, i32) {
    %c0_i32 = arith.constant 0 : i32
    %c0_i32_0 = arith.constant 0 : i32
    return %arg0, %arg1, %c0_i32 : i32, i32, i32
  }
  func.func @transform_6(%arg0: i32, %arg1: i32) -> (i32, i32) {
    %c0_i32 = arith.constant 0 : i32
    %c0_i32_0 = arith.constant 0 : i32
    %c0_i32_1 = arith.constant 0 : i32
    return %c0_i32, %c0_i32_0 : i32, i32
  }
  func.func @transform_7(%arg0: i32, %arg1: i32) -> (i32, i32) {
    %c0_i32 = arith.constant 0 : i32
    %c0_i32_0 = arith.constant 0 : i32
    %c0_i32_1 = arith.constant 0 : i32
    return %c0_i32, %c0_i32_0 : i32, i32
  }
  func.func @transform_8(%arg0: i32, %arg1: i32) -> (i32, i32) {
    %c0_i32 = arith.constant 0 : i32
    %c0_i32_0 = arith.constant 0 : i32
    %c0_i32_1 = arith.constant 0 : i32
    return %c0_i32, %c0_i32_0 : i32, i32
  }
  func.func @transform_9(%arg0: i32, %arg1: i32) -> (i32, i32) {
    %c0_i32 = arith.constant 0 : i32
    %c0_i32_0 = arith.constant 0 : i32
    %c0_i32_1 = arith.constant 0 : i32
    return %c0_i32, %c0_i32_0 : i32, i32
  }
  func.func @transform_10(%arg0: i32, %arg1: i32) -> (i32, i32, i32) {
    %c0_i32 = arith.constant 0 : i32
    %c0_i32_0 = arith.constant 0 : i32
    return %arg0, %arg1, %c0_i32 : i32, i32, i32
  }
}

module attributes {stable_mosaic.version = 11 : i64} {
  func.func @lse_kernel(%arg0: i32, %arg1: i32, %arg2: memref<8x128xbf16, #tpu.memory_space<vmem>>, %arg3: memref<128x128xbf16, #tpu.memory_space<vmem>>, %arg4: memref<8x1xf32, #tpu.memory_space<vmem>>, %arg5: memref<8x1xf32, #tpu.memory_space<vmem>>, %arg6: memref<8x1xf32, #tpu.memory_space<vmem>>) attributes {dimension_semantics = [#tpu.dimension_semantics<parallel>, #tpu.dimension_semantics<arbitrary>], iteration_bounds = array<i64: 2, 3>, scalar_prefetch = 0 : i64, scratch_operands = 2 : i64, tpu.core_type = #tpu.core_type<tc>, window_params = [{transform_indices = @transform_0, window_bounds = array<i64: 8, 128>}, {transform_indices = @transform_1, window_bounds = array<i64: 128, 128>}, {transform_indices = @transform_2, window_bounds = array<i64: 8, 1>}]} {
    %c0_i32 = arith.constant 0 : i32
    %0 = arith.cmpi eq, %arg1, %c0_i32 : i32
    %1 = arith.extui %0 : i1 to i32
    %c0_i32_0 = arith.constant 0 : i32
    %2 = arith.cmpi ne, %1, %c0_i32_0 : i32
    scf.if %2 {
      %cst_16 = arith.constant 0xFF800000 : f32
      %33 = vector.broadcast %cst_16 : f32 to vector<8x1xf32>
      %c0_17 = arith.constant 0 : index
      %c0_18 = arith.constant 0 : index
      %34 = vector.load %arg5[%c0_17, %c0_18] : memref<8x1xf32, #tpu.memory_space<vmem>>, vector<8x1xf32>
      tpu.vector_store %arg5[%c0_17, %c0_18], %33 {strides = array<i32>} : memref<8x1xf32, #tpu.memory_space<vmem>>, vector<8x1xf32>,
      %cst_19 = arith.constant 0.000000e+00 : f32
      %35 = vector.broadcast %cst_19 : f32 to vector<8x1xf32>
      %c0_20 = arith.constant 0 : index
      %c0_21 = arith.constant 0 : index
      %36 = vector.load %arg6[%c0_20, %c0_21] : memref<8x1xf32, #tpu.memory_space<vmem>>, vector<8x1xf32>
      tpu.vector_store %arg6[%c0_20, %c0_21], %35 {strides = array<i32>} : memref<8x1xf32, #tpu.memory_space<vmem>>, vector<8x1xf32>,
    } else {
    }
    %c0 = arith.constant 0 : index
    %c0_1 = arith.constant 0 : index
    %3 = vector.load %arg2[%c0, %c0_1] : memref<8x128xbf16, #tpu.memory_space<vmem>>, vector<8x128xbf16>
    %c0_2 = arith.constant 0 : index
    %c0_3 = arith.constant 0 : index
    %4 = vector.load %arg3[%c0_2, %c0_3] : memref<128x128xbf16, #tpu.memory_space<vmem>>, vector<128x128xbf16>
    %cst = arith.constant dense<0.000000e+00> : vector<8x128xf32>
    %5 = tpu.matmul %3, %4, %cst {dimension_numbers = #tpu.dot_dimension_numbers<[1], [0], [0], [1], [0, 0, 1, 1], [], []>} : vector<8x128xbf16>, vector<128x128xbf16>, vector<8x128xf32> -> vector<8x128xf32>
    %6 = tpu.iota {dimensions = array<i32: 1>} : vector<8x128xi32>
    %c128_i32 = arith.constant 128 : i32
    %7 = arith.muli %arg1, %c128_i32 : i32
    %8 = vector.broadcast %7 : i32 to vector<8x128xi32>
    %9 = arith.addi %6, %8 : vector<8x128xi32>
    %c320_i32 = arith.constant 320 : i32
    %10 = vector.broadcast %c320_i32 : i32 to vector<8x128xi32>
    %11 = arith.cmpi slt, %9, %10 : vector<8x128xi32>
    %cst_4 = arith.constant 0xFF800000 : f32
    %12 = vector.broadcast %cst_4 : f32 to vector<8x128xf32>
    %13 = arith.select %11, %5, %12 : vector<8x128xi1>, vector<8x128xf32>
    %c0_5 = arith.constant 0 : index
    %c0_6 = arith.constant 0 : index
    %14 = vector.load %arg5[%c0_5, %c0_6] : memref<8x1xf32, #tpu.memory_space<vmem>>, vector<8x1xf32>
    %cst_7 = arith.constant dense<0xFF800000> : vector<8xf32>
    %15 = vector.multi_reduction <maximumf>, %13, %cst_7 [1] : vector<8x128xf32> to vector<8xf32>
    %16 = vector.shape_cast %15 : vector<8xf32> to vector<8x1xf32>
    %17 = arith.maximumf %14, %16 : vector<8x1xf32>
    %18 = arith.subf %14, %17 : vector<8x1xf32>
    %19 = math.exp %18 : vector<8x1xf32>
    %c0_8 = arith.constant 0 : index
    %c0_9 = arith.constant 0 : index
    %20 = vector.load %arg6[%c0_8, %c0_9] : memref<8x1xf32, #tpu.memory_space<vmem>>, vector<8x1xf32>
    %21 = arith.mulf %19, %20 : vector<8x1xf32>
    %22 = vector.broadcast %17 : vector<8x1xf32> to vector<8x128xf32>
    %23 = arith.subf %13, %22 : vector<8x128xf32>
    %24 = math.exp %23 : vector<8x128xf32>
    %cst_10 = arith.constant dense<0.000000e+00> : vector<8xf32>
    %25 = vector.multi_reduction <add>, %24, %cst_10 [1] : vector<8x128xf32> to vector<8xf32>
    %26 = vector.shape_cast %25 : vector<8xf32> to vector<8x1xf32>
    %27 = arith.addf %21, %26 : vector<8x1xf32>
    %c0_11 = arith.constant 0 : index
    %c0_12 = arith.constant 0 : index
    %28 = vector.load %arg6[%c0_11, %c0_12] : memref<8x1xf32, #tpu.memory_space<vmem>>, vector<8x1xf32>
    tpu.vector_store %arg6[%c0_11, %c0_12], %27 {strides = array<i32>} : memref<8x1xf32, #tpu.memory_space<vmem>>, vector<8x1xf32>,
    %c0_13 = arith.constant 0 : index
    %c0_14 = arith.constant 0 : index
    %29 = vector.load %arg5[%c0_13, %c0_14] : memref<8x1xf32, #tpu.memory_space<vmem>>, vector<8x1xf32>
    tpu.vector_store %arg5[%c0_13, %c0_14], %17 {strides = array<i32>} : memref<8x1xf32, #tpu.memory_space<vmem>>, vector<8x1xf32>,
    %c2_i32 = arith.constant 2 : i32
    %30 = arith.cmpi eq, %arg1, %c2_i32 : i32
    %31 = arith.extui %30 : i1 to i32
    %c0_i32_15 = arith.constant 0 : i32
    %32 = arith.cmpi ne, %31, %c0_i32_15 : i32
    scf.if %32 {
      %c0_16 = arith.constant 0 : index
      %c0_17 = arith.constant 0 : index
      %33 = vector.load %arg5[%c0_16, %c0_17] : memref<8x1xf32, #tpu.memory_space<vmem>>, vector<8x1xf32>
      %c0_18 = arith.constant 0 : index
      %c0_19 = arith.constant 0 : index
      %34 = vector.load %arg6[%c0_18, %c0_19] : memref<8x1xf32, #tpu.memory_space<vmem>>, vector<8x1xf32>
      %35 = math.log %34 : vector<8x1xf32>
      %36 = arith.addf %33, %35 : vector<8x1xf32>
      %c0_20 = arith.constant 0 : index
      %c0_21 = arith.constant 0 : index
      %37 = vector.load %arg4[%c0_20, %c0_21] : memref<8x1xf32, #tpu.memory_space<vmem>>, vector<8x1xf32>
      tpu.vector_store %arg4[%c0_20, %c0_21], %36 {strides = array<i32>} : memref<8x1xf32, #tpu.memory_space<vmem>>, vector<8x1xf32>,
    } else {
    }
    return
  }
  func.func @transform_0(%arg0: i32, %arg1: i32) -> (i32, i32) {
    %c0_i32 = arith.constant 0 : i32
    %c0_i32_0 = arith.constant 0 : i32
    return %arg0, %c0_i32 : i32, i32
  }
  func.func @transform_1(%arg0: i32, %arg1: i32) -> (i32, i32) {
    %c0_i32 = arith.constant 0 : i32
    %c0_i32_0 = arith.constant 0 : i32
    return %c0_i32, %arg1 : i32, i32
  }
  func.func @transform_2(%arg0: i32, %arg1: i32) -> (i32, i32) {
    %c0_i32 = arith.constant 0 : i32
    %c0_i32_0 = arith.constant 0 : i32
    return %arg0, %c0_i32 : i32, i32
  }
}

</mosaic_0001>

<llo_original>
// kernel: branch_1_fun.2
$region0: #{branch_1_fun.2}
  #allocation0 [shape = 'u32[]', space=smem, size = 0x4, offset = 0x4, fixed_abs, tag = 'smem constant byte address 0x4 - core index']
  #allocation1 [shape = 'u32[72,128]{1,0:T(1,128)}', space=vmem, size = 0x9000, scoped, tag = 'internal scratch']
  %s0 = inlined_call_operand.vmem [shape: f32[2], index: 0, kind: input, shape index: {}]
  %s1 = inlined_call_operand.vmem [shape: f32[2], index: 1, kind: input, shape index: {}]
  %s2 = inlined_call_operand.vmem [shape: f32[2], index: 2, kind: input, shape index: {}]
  %s3 = inlined_call_operand.vmem [shape: bf16[2,8,128], index: 3, kind: input, shape index: {}]
  %s4 = inlined_call_operand.vmem [shape: bf16[2,8,128], index: 4, kind: input, shape index: {}]
  %s5 = inlined_call_operand.vmem [shape: bf16[128,128], index: 5, kind: input, shape index: {}]
  %s6 = inlined_call_operand.vmem [shape: f32[1,128], index: 6, kind: input, shape index: {}]
  %s7 = inlined_call_operand.vmem [shape: f32[1,128], index: 7, kind: input, shape index: {}]
  %s8 = inlined_call_operand.vmem [shape: f32[2,8,128], index: 8, kind: output, shape index: {}]
  %s9 = sld [smem:[#allocation0]]
  $region77: #{branch_1_fun.2} parent=0
    _
  %s11 = ssub.s32 1, %s9
  %s12 = scalar_select 0, %s11, %s9
  $region1: #{branch_1_fun.2} parent=0
    #allocation2 [shape = 'u8[512]{0}', space=smem, size = 0x200, scoped, tag = 'input window, operand 0, single buffered']
    #allocation3 [shape = 's32[2]{0}', space=sflag, size = 0x8, scoped, tag = 'scoped memory for branch_1_fun.2']
    #allocation4 [shape = 'u8[512]{0}', space=smem, size = 0x200, scoped, tag = 'input window, operand 1, single buffered']
    #allocation5 [shape = 's32[1]{0}', space=sflag, size = 0x4, scoped, tag = 'scoped memory for branch_1_fun.2']
    #allocation6 [shape = 'u8[512]{0}', space=smem, size = 0x200, scoped, tag = 'input window, operand 2, single buffered']
    %13 = vsyncpa [#allocation3], 0
    %14 = vsyncpa [#allocation5], 0
    loop: start=0, step=1, limit=4
    $region2: #{branch_1_fun.2} parent=1 // loop_pre_header
      _
    $region3: #{branch_1_fun.2} parent=1 // loop_header
      %s16 = sphi 0, %s20
      %p17 = scmp.ge.s32.totalorder %s16, 4
      %s23 = sphi 0, %s35
      %s24 = sphi 0, %s31
      %s25 = sphi 0, %s23
      %s26 = sphi 0, %s24
      %s27 = sphi 0, %s25
      %s28 = sphi 0, %s26
      %s36 = sphi 0, %s36
      %s38 = sphi 0, %s36
      %s39 = sphi 0, %s38
      %s53 = sphi 0, %s39
      %s57 = sphi 0, %s57
      %s59 = sphi 0, %s57
      %s60 = sphi 0, %s59
      %s74 = sphi 0, %s60
      %s78 = sphi 0, %s78
      %s80 = sphi 0, %s78
      %s81 = sphi 0, %s80
      %s95 = sphi 0, %s81
      %s103 = sphi 0, %s105
      %s106 = sphi 0, %s103
      %s107 = sphi 0, %s106
      %s123 = sphi 0, %s107
      %s131 = sphi 0, %s133
      %s134 = sphi 0, %s131
      %s135 = sphi 0, %s134
      %s151 = sphi 0, %s135
      %s155 = sphi 0, %s155
      %s157 = sphi 0, %s155
      %s158 = sphi 0, %s157
      %s172 = sphi 0, %s158
      %s176 = sphi 0, %s176
      %s178 = sphi 0, %s176
      %s179 = sphi 0, %s178
      %s193 = sphi 0, %s179
      %s197 = sphi 0, %s197
      %s199 = sphi 0, %s197
      %s200 = sphi 0, %s199
      %s214 = sphi 0, %s200
      %s222 = sphi 0, %s224
      %s225 = sphi 0, %s222
      %s226 = sphi 0, %s225
      %s242 = sphi 0, %s226
    $region4: #{branch_1_fun.2} parent=1 // loop_header_branch
      %19 = sbr.rel (%p17) target = $region8
    $region5: #{branch_1_fun.2} parent=1 // loop_body
      %s21 = ssub.s32 %s16, 1
      %s22 = ssub.s32 %s16, 2
      %s29 = sadd.s32 1, %s24
      %p30 = scmp.ge.s32.totalorder %s29, 1
      %s31 = scalar_select %p30, 0, %s29
      %s32 = sadd.s32 1, %s23
      %s33 = scalar_select %p30, %s32, %s23
      %p34 = scmp.ge.s32.totalorder %s33, 2
      %s35 = scalar_select %p34, 0, %s33
      %s37 = sadd.s32 %s36, 1
      %p40 = scmp.eq.s32.totalorder %s16, 1
      %p41 = scmp.ne.s32.totalorder %s36, %s38
      %p42 = scmp.eq.s32.totalorder %s16, 0
      %p43 = por %p41, %p42
      %p44 = scmp.ne.s32.totalorder %s36, %s38
      %p45 = scmp.eq.s32.totalorder %s21, 1
      %p46 = por %p44, %p45
      %p47 = scmp.ne.s32.totalorder %s38, %s39
      %p48 = scmp.eq.s32.totalorder %s21, 0
      %p49 = por %p47, %p48
      %p50 = scmp.ne.s32.totalorder %s38, %s39
      %p51 = scmp.eq.s32.totalorder %s22, 1
      %p52 = por %p50, %p51
      %p54 = scmp.ne.s32.totalorder %s39, %s53
      %p55 = scmp.eq.s32.totalorder %s22, 0
      %p56 = por %p54, %p55
      %s58 = sadd.s32 %s57, 1
      %p61 = scmp.eq.s32.totalorder %s16, 1
      %p62 = scmp.ne.s32.totalorder %s57, %s59
      %p63 = scmp.eq.s32.totalorder %s16, 0
      %p64 = por %p62, %p63
      %p65 = scmp.ne.s32.totalorder %s57, %s59
      %p66 = scmp.eq.s32.totalorder %s21, 1
      %p67 = por %p65, %p66
      %p68 = scmp.ne.s32.totalorder %s59, %s60
      %p69 = scmp.eq.s32.totalorder %s21, 0
      %p70 = por %p68, %p69
      %p71 = scmp.ne.s32.totalorder %s59, %s60
      %p72 = scmp.eq.s32.totalorder %s22, 1
      %p73 = por %p71, %p72
      %p75 = scmp.ne.s32.totalorder %s60, %s74
      %p76 = scmp.eq.s32.totalorder %s22, 0
      %p77 = por %p75, %p76
      %s79 = sadd.s32 %s78, 1
      %p82 = scmp.eq.s32.totalorder %s16, 1
      %p83 = scmp.ne.s32.totalorder %s78, %s80
      %p84 = scmp.eq.s32.totalorder %s16, 0
      %p85 = por %p83, %p84
      %p86 = scmp.ne.s32.totalorder %s78, %s80
      %p87 = scmp.eq.s32.totalorder %s21, 1
      %p88 = por %p86, %p87
      %p89 = scmp.ne.s32.totalorder %s80, %s81
      %p90 = scmp.eq.s32.totalorder %s21, 0
      %p91 = por %p89, %p90
      %p92 = scmp.ne.s32.totalorder %s80, %s81
      %p93 = scmp.eq.s32.totalorder %s22, 1
      %p94 = por %p92, %p93
      %p96 = scmp.ne.s32.totalorder %s81, %s95
      %p97 = scmp.eq.s32.totalorder %s22, 0
      %p98 = por %p96, %p97
      %s99 = ssub.s32 %s23, %s35
      %s100 = ssub.s32 %s24, %s31
      %s101 = sor.u32 %s99, %s100
      %p102 = scmp.eq.s32.totalorder %s101, 0
      %s104 = sadd.s32 %s103, 1
      %s105 = scalar_select %p102, %s103, %s104
      %p108 = pneg %p102
      %p109 = scmp.eq.s32.totalorder %s16, 1
      %p110 = por %p108, %p109
      %p111 = scmp.ne.s32.totalorder %s103, %s106
      %p112 = scmp.eq.s32.totalorder %s16, 0
      %p113 = por %p111, %p112
      %p114 = scmp.ne.s32.totalorder %s103, %s106
      %p115 = scmp.eq.s32.totalorder %s21, 1
      %p116 = por %p114, %p115
      %p117 = scmp.ne.s32.totalorder %s106, %s107
      %p118 = scmp.eq.s32.totalorder %s21, 0
      %p119 = por %p117, %p118
      %p120 = scmp.ne.s32.totalorder %s106, %s107
      %p121 = scmp.eq.s32.totalorder %s22, 1
      %p122 = por %p120, %p121
      %p124 = scmp.ne.s32.totalorder %s107, %s123
      %p125 = scmp.eq.s32.totalorder %s22, 0
      %p126 = por %p124, %p125
      %s127 = ssub.s32 %s23, %s35
      %s128 = ssub.s32 %s24, %s31
      %s129 = sor.u32 %s127, %s128
      %p130 = scmp.eq.s32.totalorder %s129, 0
      %s132 = sadd.s32 %s131, 1
      %s133 = scalar_select %p130, %s131, %s132
      %p136 = pneg %p130
      %p137 = scmp.eq.s32.totalorder %s16, 1
      %p138 = por %p136, %p137
      %p139 = scmp.ne.s32.totalorder %s131, %s134
      %p140 = scmp.eq.s32.totalorder %s16, 0
      %p141 = por %p139, %p140
      %p142 = scmp.ne.s32.totalorder %s131, %s134
      %p143 = scmp.eq.s32.totalorder %s21, 1
      %p144 = por %p142, %p143
      %p145 = scmp.ne.s32.totalorder %s134, %s135
      %p146 = scmp.eq.s32.totalorder %s21, 0
      %p147 = por %p145, %p146
      %p148 = scmp.ne.s32.totalorder %s134, %s135
      %p149 = scmp.eq.s32.totalorder %s22, 1
      %p150 = por %p148, %p149
      %p152 = scmp.ne.s32.totalorder %s135, %s151
      %p153 = scmp.eq.s32.totalorder %s22, 0
      %p154 = por %p152, %p153
      %s156 = sadd.s32 %s155, 1
      %p159 = scmp.eq.s32.totalorder %s16, 1
      %p160 = scmp.ne.s32.totalorder %s155, %s157
      %p161 = scmp.eq.s32.totalorder %s16, 0
      %p162 = por %p160, %p161
      %p163 = scmp.ne.s32.totalorder %s155, %s157
      %p164 = scmp.eq.s32.totalorder %s21, 1
      %p165 = por %p163, %p164
      %p166 = scmp.ne.s32.totalorder %s157, %s158
      %p167 = scmp.eq.s32.totalorder %s21, 0
      %p168 = por %p166, %p167
      %p169 = scmp.ne.s32.totalorder %s157, %s158
      %p170 = scmp.eq.s32.totalorder %s22, 1
      %p171 = por %p169, %p170
      %p173 = scmp.ne.s32.totalorder %s158, %s172
      %p174 = scmp.eq.s32.totalorder %s22, 0
      %p175 = por %p173, %p174
      %s177 = sadd.s32 %s176, 1
      %p180 = scmp.eq.s32.totalorder %s16, 1
      %p181 = scmp.ne.s32.totalorder %s176, %s178
      %p182 = scmp.eq.s32.totalorder %s16, 0
      %p183 = por %p181, %p182
      %p184 = scmp.ne.s32.totalorder %s176, %s178
      %p185 = scmp.eq.s32.totalorder %s21, 1
      %p186 = por %p184, %p185
      %p187 = scmp.ne.s32.totalorder %s178, %s179
      %p188 = scmp.eq.s32.totalorder %s21, 0
      %p189 = por %p187, %p188
      %p190 = scmp.ne.s32.totalorder %s178, %s179
      %p191 = scmp.eq.s32.totalorder %s22, 1
      %p192 = por %p190, %p191
      %p194 = scmp.ne.s32.totalorder %s179, %s193
      %p195 = scmp.eq.s32.totalorder %s22, 0
      %p196 = por %p194, %p195
      %s198 = sadd.s32 %s197, 1
      %p201 = scmp.eq.s32.totalorder %s16, 1
      %p202 = scmp.ne.s32.totalorder %s197, %s199
      %p203 = scmp.eq.s32.totalorder %s16, 0
      %p204 = por %p202, %p203
      %p205 = scmp.ne.s32.totalorder %s197, %s199
      %p206 = scmp.eq.s32.totalorder %s21, 1
      %p207 = por %p205, %p206
      %p208 = scmp.ne.s32.totalorder %s199, %s200
      %p209 = scmp.eq.s32.totalorder %s21, 0
      %p210 = por %p208, %p209
      %p211 = scmp.ne.s32.totalorder %s199, %s200
      %p212 = scmp.eq.s32.totalorder %s22, 1
      %p213 = por %p211, %p212
      %p215 = scmp.ne.s32.totalorder %s200, %s214
      %p216 = scmp.eq.s32.totalorder %s22, 0
      %p217 = por %p215, %p216
      %s218 = ssub.s32 %s23, %s35
      %s219 = ssub.s32 %s24, %s31
      %s220 = sor.u32 %s218, %s219
      %p221 = scmp.eq.s32.totalorder %s220, 0
      %s223 = sadd.s32 %s222, 1
      %s224 = scalar_select %p221, %s222, %s223
      %p227 = pneg %p221
      %p228 = scmp.eq.s32.totalorder %s16, 1
      %p229 = por %p227, %p228
      %p230 = scmp.ne.s32.totalorder %s222, %s225
      %p231 = scmp.eq.s32.totalorder %s16, 0
      %p232 = por %p230, %p231
      %p233 = scmp.ne.s32.totalorder %s222, %s225
      %p234 = scmp.eq.s32.totalorder %s21, 1
      %p235 = por %p233, %p234
      %p236 = scmp.ne.s32.totalorder %s225, %s226
      %p237 = scmp.eq.s32.totalorder %s21, 0
      %p238 = por %p236, %p237
      %p239 = scmp.ne.s32.totalorder %s225, %s226
      %p240 = scmp.eq.s32.totalorder %s22, 1
      %p241 = por %p239, %p240
      %p243 = scmp.ne.s32.totalorder %s226, %s242
      %p244 = scmp.eq.s32.totalorder %s22, 0
      %p245 = por %p243, %p244
      %p246 = scmp.le.s32.totalorder 1, %s16
      %p247 = scmp.lt.s32.totalorder %s16, 3
      %p248 = pnand %p246, %p247
      %p249 = pneg %p248
      // Predicated region
      $region9: #{branch_1_fun.2} parent=5 // pred_check
        _
      $region10: #{branch_1_fun.2} parent=5 // pred_check_branch
        %251 = sbr.rel (%p248) target = $region12
      $region11: #{branch_1_fun.2} parent=5 // pred_region
        %s252 = ssub.s32 %s16, 1
        // Predicated region
        $region13: #{branch_1_fun.2} parent=11 // pred_check
          %p253 = pneg %p49
        $region14: #{branch_1_fun.2} parent=11 // pred_check_branch
          %255 = sbr.rel (%p253) target = $region16
        $region15: #{branch_1_fun.2} parent=11 // pred_region
          %257 = vsyncadd [#allocation3], 0
          %s259 = sshll.u32 %s0, 4
          %s260 = int_to_ptr.vmem [resolvable:$true] %s259
          %262 = dma.vmem_to_smem %s260, 16, [#allocation2], [#allocation3]
        $region16: #{branch_1_fun.2} parent=11 // pred_fallthru
          _
        // Predicated region
        $region17: #{branch_1_fun.2} parent=11 // pred_check
          %p263 = pneg %p70
        $region18: #{branch_1_fun.2} parent=11 // pred_check_branch
          %265 = sbr.rel (%p263) target = $region20
        $region19: #{branch_1_fun.2} parent=11 // pred_region
          %267 = vsyncadd [#allocation5], 0
          %s269 = sshll.u32 %s1, 4
          %s270 = int_to_ptr.vmem [resolvable:$true] %s269
          %272 = dma.vmem_to_smem %s270, 16, [#allocation4], [#allocation5]
        $region20: #{branch_1_fun.2} parent=11 // pred_fallthru
          _
        // Predicated region
        $region21: #{branch_1_fun.2} parent=11 // pred_check
          %p273 = pneg %p91
        $region22: #{branch_1_fun.2} parent=11 // pred_check_branch
          %275 = sbr.rel (%p273) target = $region24
        $region23: #{branch_1_fun.2} parent=11 // pred_region
          %277 = vsyncadd [#allocation5], 0
          %s279 = sshll.u32 %s2, 4
          %s280 = int_to_ptr.vmem [resolvable:$true] %s279
          %282 = dma.vmem_to_smem %s280, 16, [#allocation6], [#allocation5]
        $region24: #{branch_1_fun.2} parent=11 // pred_fallthru
          _
        // Predicated region
        $region25: #{branch_1_fun.2} parent=11 // pred_check
          %p283 = pneg %p168
        $region26: #{branch_1_fun.2} parent=11 // pred_check_branch
          %285 = sbr.rel (%p283) target = $region28
        $region27: #{branch_1_fun.2} parent=11 // pred_region
          _
        $region28: #{branch_1_fun.2} parent=11 // pred_fallthru
          _
        // Predicated region
        $region29: #{branch_1_fun.2} parent=11 // pred_check
          %p286 = pneg %p189
        $region30: #{branch_1_fun.2} parent=11 // pred_check_branch
          %288 = sbr.rel (%p286) target = $region32
        $region31: #{branch_1_fun.2} parent=11 // pred_region
          _
        $region32: #{branch_1_fun.2} parent=11 // pred_fallthru
          _
        // Predicated region
        $region33: #{branch_1_fun.2} parent=11 // pred_check
          %p289 = pneg %p210
        $region34: #{branch_1_fun.2} parent=11 // pred_check_branch
          %291 = sbr.rel (%p289) target = $region36
        $region35: #{branch_1_fun.2} parent=11 // pred_region
          _
        $region36: #{branch_1_fun.2} parent=11 // pred_fallthru
          _
      $region12: #{branch_1_fun.2} parent=5 // pred_fallthru
        _
      %p292 = scmp.lt.s32.totalorder %s16, 2
      // Predicated region
      $region37: #{branch_1_fun.2} parent=5 // pred_check
        %p293 = pneg %p292
      $region38: #{branch_1_fun.2} parent=5 // pred_check_branch
        %295 = sbr.rel (%p293) target = $region40
      $region39: #{branch_1_fun.2} parent=5 // pred_region
        // Predicated region
        $region41: #{branch_1_fun.2} parent=39 // pred_check
          %p296 = pneg %p113
        $region42: #{branch_1_fun.2} parent=39 // pred_check_branch
          %298 = sbr.rel (%p296) target = $region44
        $region43: #{branch_1_fun.2} parent=39 // pred_region
          %p299 = scmp.lt.s32.totalorder %s23, 1
          %s300 = scalar_select %p299, %s23, 1
          %p301 = scmp.lt.s32.totalorder %s24, 0
          %s302 = scalar_select %p301, %s24, 0
          %s303 = sadd.s32 %s302, %s300
          %s304 = smul.addr %s303, 4
          %s305 = scalar_lea.vmem %s3, %s304
        $region44: #{branch_1_fun.2} parent=39 // pred_fallthru
          _
        // Predicated region
        $region45: #{branch_1_fun.2} parent=39 // pred_check
          %p306 = pneg %p141
        $region46: #{branch_1_fun.2} parent=39 // pred_check_branch
          %308 = sbr.rel (%p306) target = $region48
        $region47: #{branch_1_fun.2} parent=39 // pred_region
          %p309 = scmp.lt.s32.totalorder %s23, 1
          %s310 = scalar_select %p309, %s23, 1
          %p311 = scmp.lt.s32.totalorder %s24, 0
          %s312 = scalar_select %p311, %s24, 0
          %s313 = sadd.s32 %s312, %s310
          %s314 = smul.addr %s313, 4
          %s315 = scalar_lea.vmem %s4, %s314
        $region48: #{branch_1_fun.2} parent=39 // pred_fallthru
          _
      $region40: #{branch_1_fun.2} parent=5 // pred_fallthru
        _
      %p316 = scmp.le.s32.totalorder 1, %s16
      %p317 = scmp.lt.s32.totalorder %s16, 3
      %p318 = pnand %p316, %p317
      %p319 = pneg %p318
      // Predicated region
      $region49: #{branch_1_fun.2} parent=5 // pred_check
        _
      $region50: #{branch_1_fun.2} parent=5 // pred_check_branch
        %321 = sbr.rel (%p318) target = $region52
      $region51: #{branch_1_fun.2} parent=5 // pred_region
        %s322 = ssub.s32 %s16, 1
        // Predicated region
        $region53: #{branch_1_fun.2} parent=51 // pred_check
          %p323 = pneg %p49
        $region54: #{branch_1_fun.2} parent=51 // pred_check_branch
          %325 = sbr.rel (%p323) target = $region56
        $region55: #{branch_1_fun.2} parent=51 // pred_region
          %327 = dma.done [#allocation3], 16
        $region56: #{branch_1_fun.2} parent=51 // pred_fallthru
          _
        // Predicated region
        $region57: #{branch_1_fun.2} parent=51 // pred_check
          %p328 = pneg %p70
        $region58: #{branch_1_fun.2} parent=51 // pred_check_branch
          %330 = sbr.rel (%p328) target = $region60
        $region59: #{branch_1_fun.2} parent=51 // pred_region
          %332 = dma.done [#allocation5], 16
        $region60: #{branch_1_fun.2} parent=51 // pred_fallthru
          _
        // Predicated region
        $region61: #{branch_1_fun.2} parent=51 // pred_check
          %p333 = pneg %p91
        $region62: #{branch_1_fun.2} parent=51 // pred_check_branch
          %335 = sbr.rel (%p333) target = $region64
        $region63: #{branch_1_fun.2} parent=51 // pred_region
          %337 = dma.done [#allocation5], 16
        $region64: #{branch_1_fun.2} parent=51 // pred_fallthru
          _
        %338 = sfence
        %p339 = pneg %p49
        %p340 = pneg %p46
        %p341 = pneg %p70
        %p342 = pneg %p67
        %p343 = pneg %p91
        %p344 = pneg %p88
        %p345 = scmp.lt.s32.totalorder %s25, 1
        %s346 = scalar_select %p345, %s25, 1
        %p347 = scmp.lt.s32.totalorder %s26, 0
        %s348 = scalar_select %p347, %s26, 0
        %s349 = sadd.s32 %s348, %s346
        %s350 = smul.addr %s349, 4
        %s351 = scalar_lea.vmem %s3, %s350
        %p352 = pneg %p119
        %p353 = pneg %p116
        %p354 = scmp.lt.s32.totalorder %s25, 1
        %s355 = scalar_select %p354, %s25, 1
        %p356 = scmp.lt.s32.totalorder %s26, 0
        %s357 = scalar_select %p356, %s26, 0
        %s358 = sadd.s32 %s357, %s355
        %s359 = smul.addr %s358, 4
        %s360 = scalar_lea.vmem %s4, %s359
        %p361 = pneg %p147
        %p362 = pneg %p144
        %p363 = pneg %p168
        %p364 = pneg %p165
        %p365 = pneg %p189
        %p366 = pneg %p186
        %p367 = pneg %p210
        %p368 = pneg %p207
        %p369 = pneg %p238
        %p370 = pneg %p235
        %p371 = scmp.lt.s32.totalorder %s25, 1
        %s372 = scalar_select %p371, %s25, 1
        %p373 = scmp.lt.s32.totalorder %s26, 0
        %s374 = scalar_select %p373, %s26, 0
        %s375 = sadd.s32 %s374, %s372
        %s376 = smul.addr %s375, 8
        %s377 = scalar_lea.vmem %s8, %s376
        %p378 = scmp.lt.s32.totalorder %s25, 1
        %s379 = scalar_select %p378, %s25, 1
        %p380 = scmp.lt.s32.totalorder %s26, 0
        %s381 = scalar_select %p380, %s26, 0
        %s382 = sadd.s32 %s381, %s379
        %s383 = smul.addr %s382, 4
        %s384 = scalar_lea.vmem %s3, %s383
        %p385 = scmp.lt.s32.totalorder %s25, 1
        %s386 = scalar_select %p385, %s25, 1
        %p387 = scmp.lt.s32.totalorder %s26, 0
        %s388 = scalar_select %p387, %s26, 0
        %s389 = sadd.s32 %s388, %s386
        %s390 = smul.addr %s389, 4
        %s391 = scalar_lea.vmem %s4, %s390
        %p392 = scmp.lt.s32.totalorder %s25, 1
        %s393 = scalar_select %p392, %s25, 1
        %p394 = scmp.lt.s32.totalorder %s26, 0
        %s395 = scalar_select %p394, %s26, 0
        %s396 = sadd.s32 %s395, %s393
        %s397 = smul.addr %s396, 8
        %s398 = scalar_lea.vmem %s8, %s397
        %s399 = sld [smem:[#allocation2 + %s25]]
        %s400 = sld [smem:[#allocation4 + %s25]]
        %s401 = sld [smem:[#allocation6 + %s25]]
        %v402 = vld [vmem:[%s384] sm:$0xf]
        %v403 = vunpack.c.l.bf16 %v402
        %v404 = vstv %s399
        %v405 = vmul.f32 %v404, %v403
        %v406 = vld [vmem:[%s391] sm:$0xf]
        %v407 = vunpack.c.l.bf16 %v406
        %v408 = vstv %s400
        %v409 = vmul.f32 %v408, %v407
        %v410 = vadd.f32 %v405, %v409
        %v411 = vpack.c.bf16 %v410, %v410
        %v412 = vld [vmem:[%s5] sm:$0xf]
        %v413 = vld [vmem:[%s5 + $0x4] sm:$0xf]
        %v414 = vld [vmem:[%s5 + $0x8] sm:$0xf]
        %v415 = vld [vmem:[%s5 + $0xc] sm:$0xf]
        %v416 = vld [vmem:[%s5 + $0x10] sm:$0xf]
        %v417 = vld [vmem:[%s5 + $0x14] sm:$0xf]
        %v418 = vld [vmem:[%s5 + $0x18] sm:$0xf]
        %v419 = vld [vmem:[%s5 + $0x1c] sm:$0xf]
        %v420 = vld [vmem:[%s5 + $0x20] sm:$0xf]
        %v421 = vld [vmem:[%s5 + $0x24] sm:$0xf]
        %v422 = vld [vmem:[%s5 + $0x28] sm:$0xf]
        %v423 = vld [vmem:[%s5 + $0x2c] sm:$0xf]
        %v424 = vld [vmem:[%s5 + $0x30] sm:$0xf]
        %v425 = vld [vmem:[%s5 + $0x34] sm:$0xf]
        %v426 = vld [vmem:[%s5 + $0x38] sm:$0xf]
        %v427 = vld [vmem:[%s5 + $0x3c] sm:$0xf]
        %v428 = vld [vmem:[%s6] sm:$0x1]
        %v430 = vperm.slane %v428, 0
        %v448 = vunpack.c.l.b16 %v412
        %v449 = vunpack.c.l.b16 %v413
        %v450 = vunpack.c.l.b16 %v414
        %v451 = vunpack.c.l.b16 %v415
        %v452 = vunpack.c.l.b16 %v416
        %v453 = vunpack.c.l.b16 %v417
        %v454 = vunpack.c.l.b16 %v418
        %v455 = vunpack.c.l.b16 %v419
        %v456 = vunpack.c.l.b16 %v420
        %v457 = vunpack.c.l.b16 %v421
        %v458 = vunpack.c.l.b16 %v422
        %v459 = vunpack.c.l.b16 %v423
        %v460 = vunpack.c.l.b16 %v424
        %v461 = vunpack.c.l.b16 %v425
        %v462 = vunpack.c.l.b16 %v426
        %v463 = vunpack.c.l.b16 %v427
        %v464 = vpack.c.b16 %v449, %v448
        %v465 = vpack.c.b16 %v451, %v450
        %v466 = vpack.c.b16 %v453, %v452
        %v467 = vpack.c.b16 %v455, %v454
        %v468 = vpack.c.b16 %v457, %v456
        %v469 = vpack.c.b16 %v459, %v458
        %v470 = vpack.c.b16 %v461, %v460
        %v471 = vpack.c.b16 %v463, %v462
        %480 = vmatpush.bf16.msra.mxu0 %v471
        %481 = vmatpush.bf16.msra.mxu0 %v470
        %482 = vmatpush.bf16.msra.mxu0 %v469
        %483 = vmatpush.bf16.msra.mxu0 %v468
        %484 = vmatpush.bf16.msra.mxu0 %v467
        %485 = vmatpush.bf16.msra.mxu0 %v466
        %486 = vmatpush.bf16.msra.mxu0 %v465
        %487 = vmatpush.bf16.msra.mxu0 %v464
        %488 = vmatmul.bf16.gmra.mxu0 %v411
        %v489 = vpop.f32.mrf.mxu0
        %v490 = vadd.f32 %v430, %v489
        %v491 = vpop.f32.mrf.mxu0
        %492 = vdwg.mxu0
        %v493 = vld [vmem:[%s7] sm:$0x1]
        %v494 = vstv %s401
        %v495 = vmul.f32 %v494, %v493
        %v497 = vperm.slane %v495, 0
        %v499 = vadd.f32 %v490, %v497
        %500 = vst [vmem:[%s398] sm:$0xff] %v499
        %p501 = scmp.lt.s32.totalorder %s25, 1
        %s502 = scalar_select %p501, %s25, 1
        %p503 = scmp.lt.s32.totalorder %s26, 0
        %s504 = scalar_select %p503, %s26, 0
        %s505 = sadd.s32 %s504, %s502
        %s506 = smul.addr %s505, 8
        %s507 = scalar_lea.vmem %s8, %s506
        // Predicated region
        $region65: #{branch_1_fun.2} parent=51 // pred_check
          %p508 = pneg %p235
        $region66: #{branch_1_fun.2} parent=51 // pred_check_branch
          %510 = sbr.rel (%p508) target = $region68
        $region67: #{branch_1_fun.2} parent=51 // pred_region
          _
        $region68: #{branch_1_fun.2} parent=51 // pred_fallthru
          _
      $region52: #{branch_1_fun.2} parent=5 // pred_fallthru
        _
      %p511 = scmp.le.s32.totalorder 2, %s16
      // Predicated region
      $region69: #{branch_1_fun.2} parent=5 // pred_check
        %p512 = pneg %p511
      $region70: #{branch_1_fun.2} parent=5 // pred_check_branch
        %514 = sbr.rel (%p512) target = $region72
      $region71: #{branch_1_fun.2} parent=5 // pred_region
        %s515 = ssub.s32 %s16, 2
        // Predicated region
        $region73: #{branch_1_fun.2} parent=71 // pred_check
          %p516 = pneg %p241
        $region74: #{branch_1_fun.2} parent=71 // pred_check_branch
          %518 = sbr.rel (%p516) target = $region76
        $region75: #{branch_1_fun.2} parent=71 // pred_region
          %p519 = scmp.lt.s32.totalorder %s27, 1
          %s520 = scalar_select %p519, %s27, 1
          %p521 = scmp.lt.s32.totalorder %s28, 0
          %s522 = scalar_select %p521, %s28, 0
          %s523 = sadd.s32 %s522, %s520
          %s524 = smul.addr %s523, 8
          %s525 = scalar_lea.vmem %s8, %s524
        $region76: #{branch_1_fun.2} parent=71 // pred_fallthru
          _
      $region72: #{branch_1_fun.2} parent=5 // pred_fallthru
        _
    $region6: #{branch_1_fun.2} parent=1 // loop_footer
      %s20 = sadd.s32 1, %s16
    $region7: #{branch_1_fun.2} parent=1 // loop_footer_branch
      %15 = sbr.rel target = $region3
    $region8: #{branch_1_fun.2} parent=1 // loop_exit
      _
    %526 = vsyncpa [#allocation3], 1
    %s527 = scalar_lea.sflag [#allocation3], 1
    %528 = vsyncpa %s527, 1
    %529 = vsyncpa [#allocation5], 1

// kernel: branch_0_fun.1
$region0: #{branch_0_fun.1}
  #allocation0 [shape = 'u32[]', space=smem, size = 0x4, offset = 0x4, fixed_abs, tag = 'smem constant byte address 0x4 - core index']
  #allocation1 [shape = 'u32[72,128]{1,0:T(1,128)}', space=vmem, size = 0x9000, scoped, tag = 'internal scratch']
  %s0 = inlined_call_operand.vmem [shape: f32[2], index: 0, kind: input, shape index: {}]
  %s1 = inlined_call_operand.vmem [shape: f32[2], index: 1, kind: input, shape index: {}]
  %s2 = inlined_call_operand.vmem [shape: f32[2], index: 2, kind: input, shape index: {}]
  %s3 = inlined_call_operand.vmem [shape: bf16[2,8,128], index: 3, kind: input, shape index: {}]
  %s4 = inlined_call_operand.vmem [shape: bf16[2,8,128], index: 4, kind: input, shape index: {}]
  %s5 = inlined_call_operand.vmem [shape: bf16[128,128], index: 5, kind: input, shape index: {}]
  %s6 = inlined_call_operand.vmem [shape: f32[1,128], index: 6, kind: input, shape index: {}]
  %s7 = inlined_call_operand.vmem [shape: f32[1,128], index: 7, kind: input, shape index: {}]
  %s8 = inlined_call_operand.hbm [shape: f32[2,8,128], index: 8, kind: output, shape index: {}]
  %s9 = sld [smem:[#allocation0]]
  $region77: #{branch_0_fun.1} parent=0
    _
  %s11 = ssub.s32 1, %s9
  %s12 = scalar_select 0, %s11, %s9
  $region1: #{branch_0_fun.1} parent=0
    #allocation2 [shape = 'u8[512]{0}', space=smem, size = 0x200, scoped, tag = 'input window, operand 0, single buffered']
    #allocation3 [shape = 's32[2]{0}', space=sflag, size = 0x8, scoped, tag = 'scoped memory for branch_0_fun.1']
    #allocation4 [shape = 's32[2]{0}', space=sflag, size = 0x8, scoped, tag = 'scoped memory for branch_0_fun.1']
    #allocation5 [shape = 'u8[512]{0}', space=smem, size = 0x200, scoped, tag = 'input window, operand 1, single buffered']
    #allocation6 [shape = 's32[1]{0}', space=sflag, size = 0x4, scoped, tag = 'scoped memory for branch_0_fun.1']
    #allocation7 [shape = 'u8[512]{0}', space=smem, size = 0x200, scoped, tag = 'input window, operand 2, single buffered']
    #allocation8 [shape = 'u8[8192]{0}', space=vmem, size = 0x2000, scoped, tag = 'output window, operand 0']
    %13 = vsyncpa [#allocation4], 0
    %14 = vsyncpa [#allocation6], 0
    %15 = vsyncpa [#allocation3], 0
    %s16 = scalar_lea.sflag [#allocation3], 1
    %17 = vsyncpa %s16, 0
    loop: start=0, step=1, limit=4
    $region2: #{branch_0_fun.1} parent=1 // loop_pre_header
      _
    $region3: #{branch_0_fun.1} parent=1 // loop_header
      %s19 = sphi 0, %s23
      %p20 = scmp.ge.s32.totalorder %s19, 4
      %s26 = sphi 0, %s38
      %s27 = sphi 0, %s34
      %s28 = sphi 0, %s26
      %s29 = sphi 0, %s27
      %s30 = sphi 0, %s28
      %s31 = sphi 0, %s29
      %s39 = sphi 0, %s39
      %s41 = sphi 0, %s39
      %s42 = sphi 0, %s41
      %s56 = sphi 0, %s42
      %s60 = sphi 0, %s60
      %s62 = sphi 0, %s60
      %s63 = sphi 0, %s62
      %s77 = sphi 0, %s63
      %s81 = sphi 0, %s81
      %s83 = sphi 0, %s81
      %s84 = sphi 0, %s83
      %s98 = sphi 0, %s84
      %s106 = sphi 0, %s108
      %s109 = sphi 0, %s106
      %s110 = sphi 0, %s109
      %s126 = sphi 0, %s110
      %s134 = sphi 0, %s136
      %s137 = sphi 0, %s134
      %s138 = sphi 0, %s137
      %s154 = sphi 0, %s138
      %s158 = sphi 0, %s158
      %s160 = sphi 0, %s158
      %s161 = sphi 0, %s160
      %s175 = sphi 0, %s161
      %s179 = sphi 0, %s179
      %s181 = sphi 0, %s179
      %s182 = sphi 0, %s181
      %s196 = sphi 0, %s182
      %s200 = sphi 0, %s200
      %s202 = sphi 0, %s200
      %s203 = sphi 0, %s202
      %s217 = sphi 0, %s203
      %s225 = sphi 0, %s227
      %s228 = sphi 0, %s225
      %s229 = sphi 0, %s228
      %s245 = sphi 0, %s229
    $region4: #{branch_0_fun.1} parent=1 // loop_header_branch
      %22 = sbr.rel (%p20) target = $region8
    $region5: #{branch_0_fun.1} parent=1 // loop_body
      %s24 = ssub.s32 %s19, 1
      %s25 = ssub.s32 %s19, 2
      %s32 = sadd.s32 1, %s27
      %p33 = scmp.ge.s32.totalorder %s32, 1
      %s34 = scalar_select %p33, 0, %s32
      %s35 = sadd.s32 1, %s26
      %s36 = scalar_select %p33, %s35, %s26
      %p37 = scmp.ge.s32.totalorder %s36, 2
      %s38 = scalar_select %p37, 0, %s36
      %s40 = sadd.s32 %s39, 1
      %p43 = scmp.eq.s32.totalorder %s19, 1
      %p44 = scmp.ne.s32.totalorder %s39, %s41
      %p45 = scmp.eq.s32.totalorder %s19, 0
      %p46 = por %p44, %p45
      %p47 = scmp.ne.s32.totalorder %s39, %s41
      %p48 = scmp.eq.s32.totalorder %s24, 1
      %p49 = por %p47, %p48
      %p50 = scmp.ne.s32.totalorder %s41, %s42
      %p51 = scmp.eq.s32.totalorder %s24, 0
      %p52 = por %p50, %p51
      %p53 = scmp.ne.s32.totalorder %s41, %s42
      %p54 = scmp.eq.s32.totalorder %s25, 1
      %p55 = por %p53, %p54
      %p57 = scmp.ne.s32.totalorder %s42, %s56
      %p58 = scmp.eq.s32.totalorder %s25, 0
      %p59 = por %p57, %p58
      %s61 = sadd.s32 %s60, 1
      %p64 = scmp.eq.s32.totalorder %s19, 1
      %p65 = scmp.ne.s32.totalorder %s60, %s62
      %p66 = scmp.eq.s32.totalorder %s19, 0
      %p67 = por %p65, %p66
      %p68 = scmp.ne.s32.totalorder %s60, %s62
      %p69 = scmp.eq.s32.totalorder %s24, 1
      %p70 = por %p68, %p69
      %p71 = scmp.ne.s32.totalorder %s62, %s63
      %p72 = scmp.eq.s32.totalorder %s24, 0
      %p73 = por %p71, %p72
      %p74 = scmp.ne.s32.totalorder %s62, %s63
      %p75 = scmp.eq.s32.totalorder %s25, 1
      %p76 = por %p74, %p75
      %p78 = scmp.ne.s32.totalorder %s63, %s77
      %p79 = scmp.eq.s32.totalorder %s25, 0
      %p80 = por %p78, %p79
      %s82 = sadd.s32 %s81, 1
      %p85 = scmp.eq.s32.totalorder %s19, 1
      %p86 = scmp.ne.s32.totalorder %s81, %s83
      %p87 = scmp.eq.s32.totalorder %s19, 0
      %p88 = por %p86, %p87
      %p89 = scmp.ne.s32.totalorder %s81, %s83
      %p90 = scmp.eq.s32.totalorder %s24, 1
      %p91 = por %p89, %p90
      %p92 = scmp.ne.s32.totalorder %s83, %s84
      %p93 = scmp.eq.s32.totalorder %s24, 0
      %p94 = por %p92, %p93
      %p95 = scmp.ne.s32.totalorder %s83, %s84
      %p96 = scmp.eq.s32.totalorder %s25, 1
      %p97 = por %p95, %p96
      %p99 = scmp.ne.s32.totalorder %s84, %s98
      %p100 = scmp.eq.s32.totalorder %s25, 0
      %p101 = por %p99, %p100
      %s102 = ssub.s32 %s26, %s38
      %s103 = ssub.s32 %s27, %s34
      %s104 = sor.u32 %s102, %s103
      %p105 = scmp.eq.s32.totalorder %s104, 0
      %s107 = sadd.s32 %s106, 1
      %s108 = scalar_select %p105, %s106, %s107
      %p111 = pneg %p105
      %p112 = scmp.eq.s32.totalorder %s19, 1
      %p113 = por %p111, %p112
      %p114 = scmp.ne.s32.totalorder %s106, %s109
      %p115 = scmp.eq.s32.totalorder %s19, 0
      %p116 = por %p114, %p115
      %p117 = scmp.ne.s32.totalorder %s106, %s109
      %p118 = scmp.eq.s32.totalorder %s24, 1
      %p119 = por %p117, %p118
      %p120 = scmp.ne.s32.totalorder %s109, %s110
      %p121 = scmp.eq.s32.totalorder %s24, 0
      %p122 = por %p120, %p121
      %p123 = scmp.ne.s32.totalorder %s109, %s110
      %p124 = scmp.eq.s32.totalorder %s25, 1
      %p125 = por %p123, %p124
      %p127 = scmp.ne.s32.totalorder %s110, %s126
      %p128 = scmp.eq.s32.totalorder %s25, 0
      %p129 = por %p127, %p128
      %s130 = ssub.s32 %s26, %s38
      %s131 = ssub.s32 %s27, %s34
      %s132 = sor.u32 %s130, %s131
      %p133 = scmp.eq.s32.totalorder %s132, 0
      %s135 = sadd.s32 %s134, 1
      %s136 = scalar_select %p133, %s134, %s135
      %p139 = pneg %p133
      %p140 = scmp.eq.s32.totalorder %s19, 1
      %p141 = por %p139, %p140
      %p142 = scmp.ne.s32.totalorder %s134, %s137
      %p143 = scmp.eq.s32.totalorder %s19, 0
      %p144 = por %p142, %p143
      %p145 = scmp.ne.s32.totalorder %s134, %s137
      %p146 = scmp.eq.s32.totalorder %s24, 1
      %p147 = por %p145, %p146
      %p148 = scmp.ne.s32.totalorder %s137, %s138
      %p149 = scmp.eq.s32.totalorder %s24, 0
      %p150 = por %p148, %p149
      %p151 = scmp.ne.s32.totalorder %s137, %s138
      %p152 = scmp.eq.s32.totalorder %s25, 1
      %p153 = por %p151, %p152
      %p155 = scmp.ne.s32.totalorder %s138, %s154
      %p156 = scmp.eq.s32.totalorder %s25, 0
      %p157 = por %p155, %p156
      %s159 = sadd.s32 %s158, 1
      %p162 = scmp.eq.s32.totalorder %s19, 1
      %p163 = scmp.ne.s32.totalorder %s158, %s160
      %p164 = scmp.eq.s32.totalorder %s19, 0
      %p165 = por %p163, %p164
      %p166 = scmp.ne.s32.totalorder %s158, %s160
      %p167 = scmp.eq.s32.totalorder %s24, 1
      %p168 = por %p166, %p167
      %p169 = scmp.ne.s32.totalorder %s160, %s161
      %p170 = scmp.eq.s32.totalorder %s24, 0
      %p171 = por %p169, %p170
      %p172 = scmp.ne.s32.totalorder %s160, %s161
      %p173 = scmp.eq.s32.totalorder %s25, 1
      %p174 = por %p172, %p173
      %p176 = scmp.ne.s32.totalorder %s161, %s175
      %p177 = scmp.eq.s32.totalorder %s25, 0
      %p178 = por %p176, %p177
      %s180 = sadd.s32 %s179, 1
      %p183 = scmp.eq.s32.totalorder %s19, 1
      %p184 = scmp.ne.s32.totalorder %s179, %s181
      %p185 = scmp.eq.s32.totalorder %s19, 0
      %p186 = por %p184, %p185
      %p187 = scmp.ne.s32.totalorder %s179, %s181
      %p188 = scmp.eq.s32.totalorder %s24, 1
      %p189 = por %p187, %p188
      %p190 = scmp.ne.s32.totalorder %s181, %s182
      %p191 = scmp.eq.s32.totalorder %s24, 0
      %p192 = por %p190, %p191
      %p193 = scmp.ne.s32.totalorder %s181, %s182
      %p194 = scmp.eq.s32.totalorder %s25, 1
      %p195 = por %p193, %p194
      %p197 = scmp.ne.s32.totalorder %s182, %s196
      %p198 = scmp.eq.s32.totalorder %s25, 0
      %p199 = por %p197, %p198
      %s201 = sadd.s32 %s200, 1
      %p204 = scmp.eq.s32.totalorder %s19, 1
      %p205 = scmp.ne.s32.totalorder %s200, %s202
      %p206 = scmp.eq.s32.totalorder %s19, 0
      %p207 = por %p205, %p206
      %p208 = scmp.ne.s32.totalorder %s200, %s202
      %p209 = scmp.eq.s32.totalorder %s24, 1
      %p210 = por %p208, %p209
      %p211 = scmp.ne.s32.totalorder %s202, %s203
      %p212 = scmp.eq.s32.totalorder %s24, 0
      %p213 = por %p211, %p212
      %p214 = scmp.ne.s32.totalorder %s202, %s203
      %p215 = scmp.eq.s32.totalorder %s25, 1
      %p216 = por %p214, %p215
      %p218 = scmp.ne.s32.totalorder %s203, %s217
      %p219 = scmp.eq.s32.totalorder %s25, 0
      %p220 = por %p218, %p219
      %s221 = ssub.s32 %s26, %s38
      %s222 = ssub.s32 %s27, %s34
      %s223 = sor.u32 %s221, %s222
      %p224 = scmp.eq.s32.totalorder %s223, 0
      %s226 = sadd.s32 %s225, 1
      %s227 = scalar_select %p224, %s225, %s226
      %p230 = pneg %p224
      %p231 = scmp.eq.s32.totalorder %s19, 1
      %p232 = por %p230, %p231
      %p233 = scmp.ne.s32.totalorder %s225, %s228
      %p234 = scmp.eq.s32.totalorder %s19, 0
      %p235 = por %p233, %p234
      %p236 = scmp.ne.s32.totalorder %s225, %s228
      %p237 = scmp.eq.s32.totalorder %s24, 1
      %p238 = por %p236, %p237
      %p239 = scmp.ne.s32.totalorder %s228, %s229
      %p240 = scmp.eq.s32.totalorder %s24, 0
      %p241 = por %p239, %p240
      %p242 = scmp.ne.s32.totalorder %s228, %s229
      %p243 = scmp.eq.s32.totalorder %s25, 1
      %p244 = por %p242, %p243
      %p246 = scmp.ne.s32.totalorder %s229, %s245
      %p247 = scmp.eq.s32.totalorder %s25, 0
      %p248 = por %p246, %p247
      %p249 = scmp.le.s32.totalorder 1, %s19
      %p250 = scmp.lt.s32.totalorder %s19, 3
      %p251 = pnand %p249, %p250
      %p252 = pneg %p251
      // Predicated region
      $region9: #{branch_0_fun.1} parent=5 // pred_check
        _
      $region10: #{branch_0_fun.1} parent=5 // pred_check_branch
        %254 = sbr.rel (%p251) target = $region12
      $region11: #{branch_0_fun.1} parent=5 // pred_region
        %s255 = ssub.s32 %s19, 1
        // Predicated region
        $region13: #{branch_0_fun.1} parent=11 // pred_check
          %p256 = pneg %p52
        $region14: #{branch_0_fun.1} parent=11 // pred_check_branch
          %258 = sbr.rel (%p256) target = $region16
        $region15: #{branch_0_fun.1} parent=11 // pred_region
          %260 = vsyncadd [#allocation4], 0
          %s262 = sshll.u32 %s0, 4
          %s263 = int_to_ptr.vmem [resolvable:$true] %s262
          %265 = dma.vmem_to_smem %s263, 16, [#allocation2], [#allocation4]
        $region16: #{branch_0_fun.1} parent=11 // pred_fallthru
          _
        // Predicated region
        $region17: #{branch_0_fun.1} parent=11 // pred_check
          %p266 = pneg %p73
        $region18: #{branch_0_fun.1} parent=11 // pred_check_branch
          %268 = sbr.rel (%p266) target = $region20
        $region19: #{branch_0_fun.1} parent=11 // pred_region
          %270 = vsyncadd [#allocation6], 0
          %s272 = sshll.u32 %s1, 4
          %s273 = int_to_ptr.vmem [resolvable:$true] %s272
          %275 = dma.vmem_to_smem %s273, 16, [#allocation5], [#allocation6]
        $region20: #{branch_0_fun.1} parent=11 // pred_fallthru
          _
        // Predicated region
        $region21: #{branch_0_fun.1} parent=11 // pred_check
          %p276 = pneg %p94
        $region22: #{branch_0_fun.1} parent=11 // pred_check_branch
          %278 = sbr.rel (%p276) target = $region24
        $region23: #{branch_0_fun.1} parent=11 // pred_region
          %280 = vsyncadd [#allocation6], 0
          %s282 = sshll.u32 %s2, 4
          %s283 = int_to_ptr.vmem [resolvable:$true] %s282
          %285 = dma.vmem_to_smem %s283, 16, [#allocation7], [#allocation6]
        $region24: #{branch_0_fun.1} parent=11 // pred_fallthru
          _
        // Predicated region
        $region25: #{branch_0_fun.1} parent=11 // pred_check
          %p286 = pneg %p171
        $region26: #{branch_0_fun.1} parent=11 // pred_check_branch
          %288 = sbr.rel (%p286) target = $region28
        $region27: #{branch_0_fun.1} parent=11 // pred_region
          _
        $region28: #{branch_0_fun.1} parent=11 // pred_fallthru
          _
        // Predicated region
        $region29: #{branch_0_fun.1} parent=11 // pred_check
          %p289 = pneg %p192
        $region30: #{branch_0_fun.1} parent=11 // pred_check_branch
          %291 = sbr.rel (%p289) target = $region32
        $region31: #{branch_0_fun.1} parent=11 // pred_region
          _
        $region32: #{branch_0_fun.1} parent=11 // pred_fallthru
          _
        // Predicated region
        $region33: #{branch_0_fun.1} parent=11 // pred_check
          %p292 = pneg %p213
        $region34: #{branch_0_fun.1} parent=11 // pred_check_branch
          %294 = sbr.rel (%p292) target = $region36
        $region35: #{branch_0_fun.1} parent=11 // pred_region
          _
        $region36: #{branch_0_fun.1} parent=11 // pred_fallthru
          _
      $region12: #{branch_0_fun.1} parent=5 // pred_fallthru
        _
      %p295 = scmp.lt.s32.totalorder %s19, 2
      // Predicated region
      $region37: #{branch_0_fun.1} parent=5 // pred_check
        %p296 = pneg %p295
      $region38: #{branch_0_fun.1} parent=5 // pred_check_branch
        %298 = sbr.rel (%p296) target = $region40
      $region39: #{branch_0_fun.1} parent=5 // pred_region
        // Predicated region
        $region41: #{branch_0_fun.1} parent=39 // pred_check
          %p299 = pneg %p116
        $region42: #{branch_0_fun.1} parent=39 // pred_check_branch
          %301 = sbr.rel (%p299) target = $region44
        $region43: #{branch_0_fun.1} parent=39 // pred_region
          %p302 = scmp.lt.s32.totalorder %s26, 1
          %s303 = scalar_select %p302, %s26, 1
          %p304 = scmp.lt.s32.totalorder %s27, 0
          %s305 = scalar_select %p304, %s27, 0
          %s306 = sadd.s32 %s305, %s303
          %s307 = smul.addr %s306, 4
          %s308 = scalar_lea.vmem %s3, %s307
        $region44: #{branch_0_fun.1} parent=39 // pred_fallthru
          _
        // Predicated region
        $region45: #{branch_0_fun.1} parent=39 // pred_check
          %p309 = pneg %p144
        $region46: #{branch_0_fun.1} parent=39 // pred_check_branch
          %311 = sbr.rel (%p309) target = $region48
        $region47: #{branch_0_fun.1} parent=39 // pred_region
          %p312 = scmp.lt.s32.totalorder %s26, 1
          %s313 = scalar_select %p312, %s26, 1
          %p314 = scmp.lt.s32.totalorder %s27, 0
          %s315 = scalar_select %p314, %s27, 0
          %s316 = sadd.s32 %s315, %s313
          %s317 = smul.addr %s316, 4
          %s318 = scalar_lea.vmem %s4, %s317
        $region48: #{branch_0_fun.1} parent=39 // pred_fallthru
          _
      $region40: #{branch_0_fun.1} parent=5 // pred_fallthru
        _
      %p319 = scmp.le.s32.totalorder 1, %s19
      %p320 = scmp.lt.s32.totalorder %s19, 3
      %p321 = pnand %p319, %p320
      %p322 = pneg %p321
      // Predicated region
      $region49: #{branch_0_fun.1} parent=5 // pred_check
        _
      $region50: #{branch_0_fun.1} parent=5 // pred_check_branch
        %324 = sbr.rel (%p321) target = $region52
      $region51: #{branch_0_fun.1} parent=5 // pred_region
        %s325 = ssub.s32 %s19, 1
        // Predicated region
        $region53: #{branch_0_fun.1} parent=51 // pred_check
          %p326 = pneg %p52
        $region54: #{branch_0_fun.1} parent=51 // pred_check_branch
          %328 = sbr.rel (%p326) target = $region56
        $region55: #{branch_0_fun.1} parent=51 // pred_region
          %330 = dma.done [#allocation4], 16
        $region56: #{branch_0_fun.1} parent=51 // pred_fallthru
          _
        // Predicated region
        $region57: #{branch_0_fun.1} parent=51 // pred_check
          %p331 = pneg %p73
        $region58: #{branch_0_fun.1} parent=51 // pred_check_branch
          %333 = sbr.rel (%p331) target = $region60
        $region59: #{branch_0_fun.1} parent=51 // pred_region
          %335 = dma.done [#allocation6], 16
        $region60: #{branch_0_fun.1} parent=51 // pred_fallthru
          _
        // Predicated region
        $region61: #{branch_0_fun.1} parent=51 // pred_check
          %p336 = pneg %p94
        $region62: #{branch_0_fun.1} parent=51 // pred_check_branch
          %338 = sbr.rel (%p336) target = $region64
        $region63: #{branch_0_fun.1} parent=51 // pred_region
          %340 = dma.done [#allocation6], 16
        $region64: #{branch_0_fun.1} parent=51 // pred_fallthru
          _
        %341 = sfence
        %p342 = pneg %p52
        %p343 = pneg %p49
        %p344 = pneg %p73
        %p345 = pneg %p70
        %p346 = pneg %p94
        %p347 = pneg %p91
        %p348 = scmp.lt.s32.totalorder %s28, 1
        %s349 = scalar_select %p348, %s28, 1
        %p350 = scmp.lt.s32.totalorder %s29, 0
        %s351 = scalar_select %p350, %s29, 0
        %s352 = sadd.s32 %s351, %s349
        %s353 = smul.addr %s352, 4
        %s354 = scalar_lea.vmem %s3, %s353
        %p355 = pneg %p122
        %p356 = pneg %p119
        %p357 = scmp.lt.s32.totalorder %s28, 1
        %s358 = scalar_select %p357, %s28, 1
        %p359 = scmp.lt.s32.totalorder %s29, 0
        %s360 = scalar_select %p359, %s29, 0
        %s361 = sadd.s32 %s360, %s358
        %s362 = smul.addr %s361, 4
        %s363 = scalar_lea.vmem %s4, %s362
        %p364 = pneg %p150
        %p365 = pneg %p147
        %p366 = pneg %p171
        %p367 = pneg %p168
        %p368 = pneg %p192
        %p369 = pneg %p189
        %p370 = pneg %p213
        %p371 = pneg %p210
        %p372 = pneg %p241
        %p373 = pneg %p238
        %s374 = sand.u32 %s228, 1
        %s375 = scalar_lea.sflag [#allocation3], %s374
        %s376 = sand.u32 %s228, 1
        %s377 = smul.addr %s376, 8
        %s378 = scalar_lea.vmem [#allocation8], %s377
        %p379 = scmp.lt.s32.totalorder %s28, 1
        %s380 = scalar_select %p379, %s28, 1
        %p381 = scmp.lt.s32.totalorder %s29, 0
        %s382 = scalar_select %p381, %s29, 0
        %s383 = sadd.s32 %s382, %s380
        %s384 = smul.addr %s383, 4
        %s385 = scalar_lea.vmem %s3, %s384
        %p386 = scmp.lt.s32.totalorder %s28, 1
        %s387 = scalar_select %p386, %s28, 1
        %p388 = scmp.lt.s32.totalorder %s29, 0
        %s389 = scalar_select %p388, %s29, 0
        %s390 = sadd.s32 %s389, %s387
        %s391 = smul.addr %s390, 4
        %s392 = scalar_lea.vmem %s4, %s391
        %s393 = sld [smem:[#allocation2 + %s28]]
        %s394 = sld [smem:[#allocation5 + %s28]]
        %s395 = sld [smem:[#allocation7 + %s28]]
        %v396 = vld [vmem:[%s385] sm:$0xf]
        %v397 = vunpack.c.l.bf16 %v396
        %v398 = vstv %s393
        %v399 = vmul.f32 %v398, %v397
        %v400 = vld [vmem:[%s392] sm:$0xf]
        %v401 = vunpack.c.l.bf16 %v400
        %v402 = vstv %s394
        %v403 = vmul.f32 %v402, %v401
        %v404 = vadd.f32 %v399, %v403
        %v405 = vpack.c.bf16 %v404, %v404
        %v406 = vld [vmem:[%s5] sm:$0xf]
        %v407 = vld [vmem:[%s5 + $0x4] sm:$0xf]
        %v408 = vld [vmem:[%s5 + $0x8] sm:$0xf]
        %v409 = vld [vmem:[%s5 + $0xc] sm:$0xf]
        %v410 = vld [vmem:[%s5 + $0x10] sm:$0xf]
        %v411 = vld [vmem:[%s5 + $0x14] sm:$0xf]
        %v412 = vld [vmem:[%s5 + $0x18] sm:$0xf]
        %v413 = vld [vmem:[%s5 + $0x1c] sm:$0xf]
        %v414 = vld [vmem:[%s5 + $0x20] sm:$0xf]
        %v415 = vld [vmem:[%s5 + $0x24] sm:$0xf]
        %v416 = vld [vmem:[%s5 + $0x28] sm:$0xf]
        %v417 = vld [vmem:[%s5 + $0x2c] sm:$0xf]
        %v418 = vld [vmem:[%s5 + $0x30] sm:$0xf]
        %v419 = vld [vmem:[%s5 + $0x34] sm:$0xf]
        %v420 = vld [vmem:[%s5 + $0x38] sm:$0xf]
        %v421 = vld [vmem:[%s5 + $0x3c] sm:$0xf]
        %v422 = vld [vmem:[%s6] sm:$0x1]
        %v424 = vperm.slane %v422, 0
        %v442 = vunpack.c.l.b16 %v406
        %v443 = vunpack.c.l.b16 %v407
        %v444 = vunpack.c.l.b16 %v408
        %v445 = vunpack.c.l.b16 %v409
        %v446 = vunpack.c.l.b16 %v410
        %v447 = vunpack.c.l.b16 %v411
        %v448 = vunpack.c.l.b16 %v412
        %v449 = vunpack.c.l.b16 %v413
        %v450 = vunpack.c.l.b16 %v414
        %v451 = vunpack.c.l.b16 %v415
        %v452 = vunpack.c.l.b16 %v416
        %v453 = vunpack.c.l.b16 %v417
        %v454 = vunpack.c.l.b16 %v418
        %v455 = vunpack.c.l.b16 %v419
        %v456 = vunpack.c.l.b16 %v420
        %v457 = vunpack.c.l.b16 %v421
        %v458 = vpack.c.b16 %v443, %v442
        %v459 = vpack.c.b16 %v445, %v444
        %v460 = vpack.c.b16 %v447, %v446
        %v461 = vpack.c.b16 %v449, %v448
        %v462 = vpack.c.b16 %v451, %v450
        %v463 = vpack.c.b16 %v453, %v452
        %v464 = vpack.c.b16 %v455, %v454
        %v465 = vpack.c.b16 %v457, %v456
        %474 = vmatpush.bf16.msra.mxu0 %v465
        %475 = vmatpush.bf16.msra.mxu0 %v464
        %476 = vmatpush.bf16.msra.mxu0 %v463
        %477 = vmatpush.bf16.msra.mxu0 %v462
        %478 = vmatpush.bf16.msra.mxu0 %v461
        %479 = vmatpush.bf16.msra.mxu0 %v460
        %480 = vmatpush.bf16.msra.mxu0 %v459
        %481 = vmatpush.bf16.msra.mxu0 %v458
        %482 = vmatmul.bf16.gmra.mxu0 %v405
        %v483 = vpop.f32.mrf.mxu0
        %v484 = vadd.f32 %v424, %v483
        %v485 = vpop.f32.mrf.mxu0
        %486 = vdwg.mxu0
        %v487 = vld [vmem:[%s7] sm:$0x1]
        %v488 = vstv %s395
        %v489 = vmul.f32 %v488, %v487
        %v491 = vperm.slane %v489, 0
        %v493 = vadd.f32 %v484, %v491
        %494 = vst [vmem:[%s378] sm:$0xff] %v493
        %s495 = sand.u32 %s228, 1
        %s496 = scalar_lea.sflag [#allocation3], %s495
        %s497 = sand.u32 %s228, 1
        %s498 = smul.addr %s497, 8
        %s499 = scalar_lea.vmem [#allocation8], %s498
        // Predicated region
        $region65: #{branch_0_fun.1} parent=51 // pred_check
          %p500 = pneg %p238
        $region66: #{branch_0_fun.1} parent=51 // pred_check_branch
          %502 = sbr.rel (%p500) target = $region68
        $region67: #{branch_0_fun.1} parent=51 // pred_region
          %504 = vsyncadd %s496, 0
          %s505 = sadd.s32 %s29, %s28
          %s506 = smul.addr %s505, 8
          %s507 = scalar_lea.hbm %s8, %s506
          %s509 = sshll.u32 %s499, 4
          %s510 = int_to_ptr.vmem [resolvable:$true] %s509
          %s511 = sshll.u32 %s507, 4
          %s512 = int_to_ptr.hbm [resolvable:$true] %s511
          %514 = dma.vmem_to_hbm [thread:$0]  %s510, 128, %s512, %s496
        $region68: #{branch_0_fun.1} parent=51 // pred_fallthru
          _
      $region52: #{branch_0_fun.1} parent=5 // pred_fallthru
        _
      %p515 = scmp.le.s32.totalorder 2, %s19
      // Predicated region
      $region69: #{branch_0_fun.1} parent=5 // pred_check
        %p516 = pneg %p515
      $region70: #{branch_0_fun.1} parent=5 // pred_check_branch
        %518 = sbr.rel (%p516) target = $region72
      $region71: #{branch_0_fun.1} parent=5 // pred_region
        %s519 = ssub.s32 %s19, 2
        // Predicated region
        $region73: #{branch_0_fun.1} parent=71 // pred_check
          %p520 = pneg %p244
        $region74: #{branch_0_fun.1} parent=71 // pred_check_branch
          %522 = sbr.rel (%p520) target = $region76
        $region75: #{branch_0_fun.1} parent=71 // pred_region
          %s523 = sand.u32 %s229, 1
          %s524 = scalar_lea.sflag [#allocation3], %s523
          %s525 = sand.u32 %s229, 1
          %s526 = smul.addr %s525, 8
          %s527 = scalar_lea.vmem [#allocation8], %s526
          %529 = dma.done %s524, 128
        $region76: #{branch_0_fun.1} parent=71 // pred_fallthru
          _
      $region72: #{branch_0_fun.1} parent=5 // pred_fallthru
        _
    $region6: #{branch_0_fun.1} parent=1 // loop_footer
      %s23 = sadd.s32 1, %s19
    $region7: #{branch_0_fun.1} parent=1 // loop_footer_branch
      %18 = sbr.rel target = $region3
    $region8: #{branch_0_fun.1} parent=1 // loop_exit
      _
    %530 = vsyncpa [#allocation3], 1
    %s531 = scalar_lea.sflag [#allocation3], 1
    %532 = vsyncpa %s531, 1
    %533 = vsyncpa [#allocation4], 1
    %s534 = scalar_lea.sflag [#allocation4], 1
    %535 = vsyncpa %s534, 1
    %536 = vsyncpa [#allocation6], 1

// kernel: branch_1_fun.3
$region0: #{branch_1_fun.3}
  #allocation0 [shape = 'u32[]', space=smem, size = 0x4, offset = 0x4, fixed_abs, tag = 'smem constant byte address 0x4 - core index']
  #allocation1 [shape = 'u32[72,128]{1,0:T(1,128)}', space=vmem, size = 0x9000, scoped, tag = 'internal scratch']
  %s0 = inlined_call_operand.vmem [shape: f32[2], index: 0, kind: input, shape index: {}]
  %s1 = inlined_call_operand.vmem [shape: f32[2], index: 1, kind: input, shape index: {}]
  %s2 = inlined_call_operand.vmem [shape: f32[2], index: 2, kind: input, shape index: {}]
  %s3 = inlined_call_operand.vmem [shape: bf16[2,8,128], index: 3, kind: input, shape index: {}]
  %s4 = inlined_call_operand.vmem [shape: bf16[2,8,128], index: 4, kind: input, shape index: {}]
  %s5 = inlined_call_operand.vmem [shape: bf16[2,8,128], index: 5, kind: input, shape index: {}]
  %s6 = inlined_call_operand.vmem [shape: bf16[128,128], index: 6, kind: input, shape index: {}]
  %s7 = inlined_call_operand.vmem [shape: bf16[128,128], index: 7, kind: input, shape index: {}]
  %s8 = inlined_call_operand.vmem [shape: f32[1,128], index: 8, kind: input, shape index: {}]
  %s9 = inlined_call_operand.vmem [shape: f32[1,128], index: 9, kind: input, shape index: {}]
  %s10 = inlined_call_operand.hbm [shape: f32[2,8,128], index: 10, kind: output, shape index: {}]
  %s11 = sld [smem:[#allocation0]]
  $region85: #{branch_1_fun.3} parent=0
    _
  %s13 = ssub.s32 1, %s11
  %s14 = scalar_select 0, %s13, %s11
  $region1: #{branch_1_fun.3} parent=0
    #allocation2 [shape = 'u8[512]{0}', space=smem, size = 0x200, scoped, tag = 'input window, operand 0, single buffered']
    #allocation3 [shape = 's32[2]{0}', space=sflag, size = 0x8, scoped, tag = 'scoped memory for branch_1_fun.3']
    #allocation4 [shape = 's32[2]{0}', space=sflag, size = 0x8, scoped, tag = 'scoped memory for branch_1_fun.3']
    #allocation5 [shape = 'u8[512]{0}', space=smem, size = 0x200, scoped, tag = 'input window, operand 1, single buffered']
    #allocation6 [shape = 's32[1]{0}', space=sflag, size = 0x4, scoped, tag = 'scoped memory for branch_1_fun.3']
    #allocation7 [shape = 'u8[512]{0}', space=smem, size = 0x200, scoped, tag = 'input window, operand 2, single buffered']
    #allocation8 [shape = 'u8[8192]{0}', space=vmem, size = 0x2000, scoped, tag = 'output window, operand 0']
    %15 = vsyncpa [#allocation4], 0
    %16 = vsyncpa [#allocation6], 0
    %17 = vsyncpa [#allocation3], 0
    %s18 = scalar_lea.sflag [#allocation3], 1
    %19 = vsyncpa %s18, 0
    loop: start=0, step=1, limit=4
    $region2: #{branch_1_fun.3} parent=1 // loop_pre_header
      _
    $region3: #{branch_1_fun.3} parent=1 // loop_header
      %s21 = sphi 0, %s25
      %p22 = scmp.ge.s32.totalorder %s21, 4
      %s28 = sphi 0, %s40
      %s29 = sphi 0, %s36
      %s30 = sphi 0, %s28
      %s31 = sphi 0, %s29
      %s32 = sphi 0, %s30
      %s33 = sphi 0, %s31
      %s41 = sphi 0, %s41
      %s43 = sphi 0, %s41
      %s44 = sphi 0, %s43
      %s58 = sphi 0, %s44
      %s62 = sphi 0, %s62
      %s64 = sphi 0, %s62
      %s65 = sphi 0, %s64
      %s79 = sphi 0, %s65
      %s83 = sphi 0, %s83
      %s85 = sphi 0, %s83
      %s86 = sphi 0, %s85
      %s100 = sphi 0, %s86
      %s108 = sphi 0, %s110
      %s111 = sphi 0, %s108
      %s112 = sphi 0, %s111
      %s128 = sphi 0, %s112
      %s136 = sphi 0, %s138
      %s139 = sphi 0, %s136
      %s140 = sphi 0, %s139
      %s156 = sphi 0, %s140
      %s164 = sphi 0, %s166
      %s167 = sphi 0, %s164
      %s168 = sphi 0, %s167
      %s184 = sphi 0, %s168
      %s188 = sphi 0, %s188
      %s190 = sphi 0, %s188
      %s191 = sphi 0, %s190
      %s205 = sphi 0, %s191
      %s209 = sphi 0, %s209
      %s211 = sphi 0, %s209
      %s212 = sphi 0, %s211
      %s226 = sphi 0, %s212
      %s230 = sphi 0, %s230
      %s232 = sphi 0, %s230
      %s233 = sphi 0, %s232
      %s247 = sphi 0, %s233
      %s251 = sphi 0, %s251
      %s253 = sphi 0, %s251
      %s254 = sphi 0, %s253
      %s268 = sphi 0, %s254
      %s276 = sphi 0, %s278
      %s279 = sphi 0, %s276
      %s280 = sphi 0, %s279
      %s296 = sphi 0, %s280
    $region4: #{branch_1_fun.3} parent=1 // loop_header_branch
      %24 = sbr.rel (%p22) target = $region8
    $region5: #{branch_1_fun.3} parent=1 // loop_body
      %s26 = ssub.s32 %s21, 1
      %s27 = ssub.s32 %s21, 2
      %s34 = sadd.s32 1, %s29
      %p35 = scmp.ge.s32.totalorder %s34, 1
      %s36 = scalar_select %p35, 0, %s34
      %s37 = sadd.s32 1, %s28
      %s38 = scalar_select %p35, %s37, %s28
      %p39 = scmp.ge.s32.totalorder %s38, 2
      %s40 = scalar_select %p39, 0, %s38
      %s42 = sadd.s32 %s41, 1
      %p45 = scmp.eq.s32.totalorder %s21, 1
      %p46 = scmp.ne.s32.totalorder %s41, %s43
      %p47 = scmp.eq.s32.totalorder %s21, 0
      %p48 = por %p46, %p47
      %p49 = scmp.ne.s32.totalorder %s41, %s43
      %p50 = scmp.eq.s32.totalorder %s26, 1
      %p51 = por %p49, %p50
      %p52 = scmp.ne.s32.totalorder %s43, %s44
      %p53 = scmp.eq.s32.totalorder %s26, 0
      %p54 = por %p52, %p53
      %p55 = scmp.ne.s32.totalorder %s43, %s44
      %p56 = scmp.eq.s32.totalorder %s27, 1
      %p57 = por %p55, %p56
      %p59 = scmp.ne.s32.totalorder %s44, %s58
      %p60 = scmp.eq.s32.totalorder %s27, 0
      %p61 = por %p59, %p60
      %s63 = sadd.s32 %s62, 1
      %p66 = scmp.eq.s32.totalorder %s21, 1
      %p67 = scmp.ne.s32.totalorder %s62, %s64
      %p68 = scmp.eq.s32.totalorder %s21, 0
      %p69 = por %p67, %p68
      %p70 = scmp.ne.s32.totalorder %s62, %s64
      %p71 = scmp.eq.s32.totalorder %s26, 1
      %p72 = por %p70, %p71
      %p73 = scmp.ne.s32.totalorder %s64, %s65
      %p74 = scmp.eq.s32.totalorder %s26, 0
      %p75 = por %p73, %p74
      %p76 = scmp.ne.s32.totalorder %s64, %s65
      %p77 = scmp.eq.s32.totalorder %s27, 1
      %p78 = por %p76, %p77
      %p80 = scmp.ne.s32.totalorder %s65, %s79
      %p81 = scmp.eq.s32.totalorder %s27, 0
      %p82 = por %p80, %p81
      %s84 = sadd.s32 %s83, 1
      %p87 = scmp.eq.s32.totalorder %s21, 1
      %p88 = scmp.ne.s32.totalorder %s83, %s85
      %p89 = scmp.eq.s32.totalorder %s21, 0
      %p90 = por %p88, %p89
      %p91 = scmp.ne.s32.totalorder %s83, %s85
      %p92 = scmp.eq.s32.totalorder %s26, 1
      %p93 = por %p91, %p92
      %p94 = scmp.ne.s32.totalorder %s85, %s86
      %p95 = scmp.eq.s32.totalorder %s26, 0
      %p96 = por %p94, %p95
      %p97 = scmp.ne.s32.totalorder %s85, %s86
      %p98 = scmp.eq.s32.totalorder %s27, 1
      %p99 = por %p97, %p98
      %p101 = scmp.ne.s32.totalorder %s86, %s100
      %p102 = scmp.eq.s32.totalorder %s27, 0
      %p103 = por %p101, %p102
      %s104 = ssub.s32 %s28, %s40
      %s105 = ssub.s32 %s29, %s36
      %s106 = sor.u32 %s104, %s105
      %p107 = scmp.eq.s32.totalorder %s106, 0
      %s109 = sadd.s32 %s108, 1
      %s110 = scalar_select %p107, %s108, %s109
      %p113 = pneg %p107
      %p114 = scmp.eq.s32.totalorder %s21, 1
      %p115 = por %p113, %p114
      %p116 = scmp.ne.s32.totalorder %s108, %s111
      %p117 = scmp.eq.s32.totalorder %s21, 0
      %p118 = por %p116, %p117
      %p119 = scmp.ne.s32.totalorder %s108, %s111
      %p120 = scmp.eq.s32.totalorder %s26, 1
      %p121 = por %p119, %p120
      %p122 = scmp.ne.s32.totalorder %s111, %s112
      %p123 = scmp.eq.s32.totalorder %s26, 0
      %p124 = por %p122, %p123
      %p125 = scmp.ne.s32.totalorder %s111, %s112
      %p126 = scmp.eq.s32.totalorder %s27, 1
      %p127 = por %p125, %p126
      %p129 = scmp.ne.s32.totalorder %s112, %s128
      %p130 = scmp.eq.s32.totalorder %s27, 0
      %p131 = por %p129, %p130
      %s132 = ssub.s32 %s28, %s40
      %s133 = ssub.s32 %s29, %s36
      %s134 = sor.u32 %s132, %s133
      %p135 = scmp.eq.s32.totalorder %s134, 0
      %s137 = sadd.s32 %s136, 1
      %s138 = scalar_select %p135, %s136, %s137
      %p141 = pneg %p135
      %p142 = scmp.eq.s32.totalorder %s21, 1
      %p143 = por %p141, %p142
      %p144 = scmp.ne.s32.totalorder %s136, %s139
      %p145 = scmp.eq.s32.totalorder %s21, 0
      %p146 = por %p144, %p145
      %p147 = scmp.ne.s32.totalorder %s136, %s139
      %p148 = scmp.eq.s32.totalorder %s26, 1
      %p149 = por %p147, %p148
      %p150 = scmp.ne.s32.totalorder %s139, %s140
      %p151 = scmp.eq.s32.totalorder %s26, 0
      %p152 = por %p150, %p151
      %p153 = scmp.ne.s32.totalorder %s139, %s140
      %p154 = scmp.eq.s32.totalorder %s27, 1
      %p155 = por %p153, %p154
      %p157 = scmp.ne.s32.totalorder %s140, %s156
      %p158 = scmp.eq.s32.totalorder %s27, 0
      %p159 = por %p157, %p158
      %s160 = ssub.s32 %s28, %s40
      %s161 = ssub.s32 %s29, %s36
      %s162 = sor.u32 %s160, %s161
      %p163 = scmp.eq.s32.totalorder %s162, 0
      %s165 = sadd.s32 %s164, 1
      %s166 = scalar_select %p163, %s164, %s165
      %p169 = pneg %p163
      %p170 = scmp.eq.s32.totalorder %s21, 1
      %p171 = por %p169, %p170
      %p172 = scmp.ne.s32.totalorder %s164, %s167
      %p173 = scmp.eq.s32.totalorder %s21, 0
      %p174 = por %p172, %p173
      %p175 = scmp.ne.s32.totalorder %s164, %s167
      %p176 = scmp.eq.s32.totalorder %s26, 1
      %p177 = por %p175, %p176
      %p178 = scmp.ne.s32.totalorder %s167, %s168
      %p179 = scmp.eq.s32.totalorder %s26, 0
      %p180 = por %p178, %p179
      %p181 = scmp.ne.s32.totalorder %s167, %s168
      %p182 = scmp.eq.s32.totalorder %s27, 1
      %p183 = por %p181, %p182
      %p185 = scmp.ne.s32.totalorder %s168, %s184
      %p186 = scmp.eq.s32.totalorder %s27, 0
      %p187 = por %p185, %p186
      %s189 = sadd.s32 %s188, 1
      %p192 = scmp.eq.s32.totalorder %s21, 1
      %p193 = scmp.ne.s32.totalorder %s188, %s190
      %p194 = scmp.eq.s32.totalorder %s21, 0
      %p195 = por %p193, %p194
      %p196 = scmp.ne.s32.totalorder %s188, %s190
      %p197 = scmp.eq.s32.totalorder %s26, 1
      %p198 = por %p196, %p197
      %p199 = scmp.ne.s32.totalorder %s190, %s191
      %p200 = scmp.eq.s32.totalorder %s26, 0
      %p201 = por %p199, %p200
      %p202 = scmp.ne.s32.totalorder %s190, %s191
      %p203 = scmp.eq.s32.totalorder %s27, 1
      %p204 = por %p202, %p203
      %p206 = scmp.ne.s32.totalorder %s191, %s205
      %p207 = scmp.eq.s32.totalorder %s27, 0
      %p208 = por %p206, %p207
      %s210 = sadd.s32 %s209, 1
      %p213 = scmp.eq.s32.totalorder %s21, 1
      %p214 = scmp.ne.s32.totalorder %s209, %s211
      %p215 = scmp.eq.s32.totalorder %s21, 0
      %p216 = por %p214, %p215
      %p217 = scmp.ne.s32.totalorder %s209, %s211
      %p218 = scmp.eq.s32.totalorder %s26, 1
      %p219 = por %p217, %p218
      %p220 = scmp.ne.s32.totalorder %s211, %s212
      %p221 = scmp.eq.s32.totalorder %s26, 0
      %p222 = por %p220, %p221
      %p223 = scmp.ne.s32.totalorder %s211, %s212
      %p224 = scmp.eq.s32.totalorder %s27, 1
      %p225 = por %p223, %p224
      %p227 = scmp.ne.s32.totalorder %s212, %s226
      %p228 = scmp.eq.s32.totalorder %s27, 0
      %p229 = por %p227, %p228
      %s231 = sadd.s32 %s230, 1
      %p234 = scmp.eq.s32.totalorder %s21, 1
      %p235 = scmp.ne.s32.totalorder %s230, %s232
      %p236 = scmp.eq.s32.totalorder %s21, 0
      %p237 = por %p235, %p236
      %p238 = scmp.ne.s32.totalorder %s230, %s232
      %p239 = scmp.eq.s32.totalorder %s26, 1
      %p240 = por %p238, %p239
      %p241 = scmp.ne.s32.totalorder %s232, %s233
      %p242 = scmp.eq.s32.totalorder %s26, 0
      %p243 = por %p241, %p242
      %p244 = scmp.ne.s32.totalorder %s232, %s233
      %p245 = scmp.eq.s32.totalorder %s27, 1
      %p246 = por %p244, %p245
      %p248 = scmp.ne.s32.totalorder %s233, %s247
      %p249 = scmp.eq.s32.totalorder %s27, 0
      %p250 = por %p248, %p249
      %s252 = sadd.s32 %s251, 1
      %p255 = scmp.eq.s32.totalorder %s21, 1
      %p256 = scmp.ne.s32.totalorder %s251, %s253
      %p257 = scmp.eq.s32.totalorder %s21, 0
      %p258 = por %p256, %p257
      %p259 = scmp.ne.s32.totalorder %s251, %s253
      %p260 = scmp.eq.s32.totalorder %s26, 1
      %p261 = por %p259, %p260
      %p262 = scmp.ne.s32.totalorder %s253, %s254
      %p263 = scmp.eq.s32.totalorder %s26, 0
      %p264 = por %p262, %p263
      %p265 = scmp.ne.s32.totalorder %s253, %s254
      %p266 = scmp.eq.s32.totalorder %s27, 1
      %p267 = por %p265, %p266
      %p269 = scmp.ne.s32.totalorder %s254, %s268
      %p270 = scmp.eq.s32.totalorder %s27, 0
      %p271 = por %p269, %p270
      %s272 = ssub.s32 %s28, %s40
      %s273 = ssub.s32 %s29, %s36
      %s274 = sor.u32 %s272, %s273
      %p275 = scmp.eq.s32.totalorder %s274, 0
      %s277 = sadd.s32 %s276, 1
      %s278 = scalar_select %p275, %s276, %s277
      %p281 = pneg %p275
      %p282 = scmp.eq.s32.totalorder %s21, 1
      %p283 = por %p281, %p282
      %p284 = scmp.ne.s32.totalorder %s276, %s279
      %p285 = scmp.eq.s32.totalorder %s21, 0
      %p286 = por %p284, %p285
      %p287 = scmp.ne.s32.totalorder %s276, %s279
      %p288 = scmp.eq.s32.totalorder %s26, 1
      %p289 = por %p287, %p288
      %p290 = scmp.ne.s32.totalorder %s279, %s280
      %p291 = scmp.eq.s32.totalorder %s26, 0
      %p292 = por %p290, %p291
      %p293 = scmp.ne.s32.totalorder %s279, %s280
      %p294 = scmp.eq.s32.totalorder %s27, 1
      %p295 = por %p293, %p294
      %p297 = scmp.ne.s32.totalorder %s280, %s296
      %p298 = scmp.eq.s32.totalorder %s27, 0
      %p299 = por %p297, %p298
      %p300 = scmp.le.s32.totalorder 1, %s21
      %p301 = scmp.lt.s32.totalorder %s21, 3
      %p302 = pnand %p300, %p301
      %p303 = pneg %p302
      // Predicated region
      $region9: #{branch_1_fun.3} parent=5 // pred_check
        _
      $region10: #{branch_1_fun.3} parent=5 // pred_check_branch
        %305 = sbr.rel (%p302) target = $region12
      $region11: #{branch_1_fun.3} parent=5 // pred_region
        %s306 = ssub.s32 %s21, 1
        // Predicated region
        $region13: #{branch_1_fun.3} parent=11 // pred_check
          %p307 = pneg %p54
        $region14: #{branch_1_fun.3} parent=11 // pred_check_branch
          %309 = sbr.rel (%p307) target = $region16
        $region15: #{branch_1_fun.3} parent=11 // pred_region
          %311 = vsyncadd [#allocation4], 0
          %s313 = sshll.u32 %s0, 4
          %s314 = int_to_ptr.vmem [resolvable:$true] %s313
          %316 = dma.vmem_to_smem %s314, 16, [#allocation2], [#allocation4]
        $region16: #{branch_1_fun.3} parent=11 // pred_fallthru
          _
        // Predicated region
        $region17: #{branch_1_fun.3} parent=11 // pred_check
          %p317 = pneg %p75
        $region18: #{branch_1_fun.3} parent=11 // pred_check_branch
          %319 = sbr.rel (%p317) target = $region20
        $region19: #{branch_1_fun.3} parent=11 // pred_region
          %321 = vsyncadd [#allocation6], 0
          %s323 = sshll.u32 %s1, 4
          %s324 = int_to_ptr.vmem [resolvable:$true] %s323
          %326 = dma.vmem_to_smem %s324, 16, [#allocation5], [#allocation6]
        $region20: #{branch_1_fun.3} parent=11 // pred_fallthru
          _
        // Predicated region
        $region21: #{branch_1_fun.3} parent=11 // pred_check
          %p327 = pneg %p96
        $region22: #{branch_1_fun.3} parent=11 // pred_check_branch
          %329 = sbr.rel (%p327) target = $region24
        $region23: #{branch_1_fun.3} parent=11 // pred_region
          %331 = vsyncadd [#allocation6], 0
          %s333 = sshll.u32 %s2, 4
          %s334 = int_to_ptr.vmem [resolvable:$true] %s333
          %336 = dma.vmem_to_smem %s334, 16, [#allocation7], [#allocation6]
        $region24: #{branch_1_fun.3} parent=11 // pred_fallthru
          _
        // Predicated region
        $region25: #{branch_1_fun.3} parent=11 // pred_check
          %p337 = pneg %p201
        $region26: #{branch_1_fun.3} parent=11 // pred_check_branch
          %339 = sbr.rel (%p337) target = $region28
        $region27: #{branch_1_fun.3} parent=11 // pred_region
          _
        $region28: #{branch_1_fun.3} parent=11 // pred_fallthru
          _
        // Predicated region
        $region29: #{branch_1_fun.3} parent=11 // pred_check
          %p340 = pneg %p222
        $region30: #{branch_1_fun.3} parent=11 // pred_check_branch
          %342 = sbr.rel (%p340) target = $region32
        $region31: #{branch_1_fun.3} parent=11 // pred_region
          _
        $region32: #{branch_1_fun.3} parent=11 // pred_fallthru
          _
        // Predicated region
        $region33: #{branch_1_fun.3} parent=11 // pred_check
          %p343 = pneg %p243
        $region34: #{branch_1_fun.3} parent=11 // pred_check_branch
          %345 = sbr.rel (%p343) target = $region36
        $region35: #{branch_1_fun.3} parent=11 // pred_region
          _
        $region36: #{branch_1_fun.3} parent=11 // pred_fallthru
          _
        // Predicated region
        $region37: #{branch_1_fun.3} parent=11 // pred_check
          %p346 = pneg %p264
        $region38: #{branch_1_fun.3} parent=11 // pred_check_branch
          %348 = sbr.rel (%p346) target = $region40
        $region39: #{branch_1_fun.3} parent=11 // pred_region
          _
        $region40: #{branch_1_fun.3} parent=11 // pred_fallthru
          _
      $region12: #{branch_1_fun.3} parent=5 // pred_fallthru
        _
      %p349 = scmp.lt.s32.totalorder %s21, 2
      // Predicated region
      $region41: #{branch_1_fun.3} parent=5 // pred_check
        %p350 = pneg %p349
      $region42: #{branch_1_fun.3} parent=5 // pred_check_branch
        %352 = sbr.rel (%p350) target = $region44
      $region43: #{branch_1_fun.3} parent=5 // pred_region
        // Predicated region
        $region45: #{branch_1_fun.3} parent=43 // pred_check
          %p353 = pneg %p118
        $region46: #{branch_1_fun.3} parent=43 // pred_check_branch
          %355 = sbr.rel (%p353) target = $region48
        $region47: #{branch_1_fun.3} parent=43 // pred_region
          %p356 = scmp.lt.s32.totalorder %s28, 1
          %s357 = scalar_select %p356, %s28, 1
          %p358 = scmp.lt.s32.totalorder %s29, 0
          %s359 = scalar_select %p358, %s29, 0
          %s360 = sadd.s32 %s359, %s357
          %s361 = smul.addr %s360, 4
          %s362 = scalar_lea.vmem %s3, %s361
        $region48: #{branch_1_fun.3} parent=43 // pred_fallthru
          _
        // Predicated region
        $region49: #{branch_1_fun.3} parent=43 // pred_check
          %p363 = pneg %p146
        $region50: #{branch_1_fun.3} parent=43 // pred_check_branch
          %365 = sbr.rel (%p363) target = $region52
        $region51: #{branch_1_fun.3} parent=43 // pred_region
          %p366 = scmp.lt.s32.totalorder %s28, 1
          %s367 = scalar_select %p366, %s28, 1
          %p368 = scmp.lt.s32.totalorder %s29, 0
          %s369 = scalar_select %p368, %s29, 0
          %s370 = sadd.s32 %s369, %s367
          %s371 = smul.addr %s370, 4
          %s372 = scalar_lea.vmem %s4, %s371
        $region52: #{branch_1_fun.3} parent=43 // pred_fallthru
          _
        // Predicated region
        $region53: #{branch_1_fun.3} parent=43 // pred_check
          %p373 = pneg %p174
        $region54: #{branch_1_fun.3} parent=43 // pred_check_branch
          %375 = sbr.rel (%p373) target = $region56
        $region55: #{branch_1_fun.3} parent=43 // pred_region
          %p376 = scmp.lt.s32.totalorder %s28, 1
          %s377 = scalar_select %p376, %s28, 1
          %p378 = scmp.lt.s32.totalorder %s29, 0
          %s379 = scalar_select %p378, %s29, 0
          %s380 = sadd.s32 %s379, %s377
          %s381 = smul.addr %s380, 4
          %s382 = scalar_lea.vmem %s5, %s381
        $region56: #{branch_1_fun.3} parent=43 // pred_fallthru
          _
      $region44: #{branch_1_fun.3} parent=5 // pred_fallthru
        _
      %p383 = scmp.le.s32.totalorder 1, %s21
      %p384 = scmp.lt.s32.totalorder %s21, 3
      %p385 = pnand %p383, %p384
      %p386 = pneg %p385
      // Predicated region
      $region57: #{branch_1_fun.3} parent=5 // pred_check
        _
      $region58: #{branch_1_fun.3} parent=5 // pred_check_branch
        %388 = sbr.rel (%p385) target = $region60
      $region59: #{branch_1_fun.3} parent=5 // pred_region
        %s389 = ssub.s32 %s21, 1
        // Predicated region
        $region61: #{branch_1_fun.3} parent=59 // pred_check
          %p390 = pneg %p54
        $region62: #{branch_1_fun.3} parent=59 // pred_check_branch
          %392 = sbr.rel (%p390) target = $region64
        $region63: #{branch_1_fun.3} parent=59 // pred_region
          %394 = dma.done [#allocation4], 16
        $region64: #{branch_1_fun.3} parent=59 // pred_fallthru
          _
        // Predicated region
        $region65: #{branch_1_fun.3} parent=59 // pred_check
          %p395 = pneg %p75
        $region66: #{branch_1_fun.3} parent=59 // pred_check_branch
          %397 = sbr.rel (%p395) target = $region68
        $region67: #{branch_1_fun.3} parent=59 // pred_region
          %399 = dma.done [#allocation6], 16
        $region68: #{branch_1_fun.3} parent=59 // pred_fallthru
          _
        // Predicated region
        $region69: #{branch_1_fun.3} parent=59 // pred_check
          %p400 = pneg %p96
        $region70: #{branch_1_fun.3} parent=59 // pred_check_branch
          %402 = sbr.rel (%p400) target = $region72
        $region71: #{branch_1_fun.3} parent=59 // pred_region
          %404 = dma.done [#allocation6], 16
        $region72: #{branch_1_fun.3} parent=59 // pred_fallthru
          _
        %405 = sfence
        %p406 = pneg %p54
        %p407 = pneg %p51
        %p408 = pneg %p75
        %p409 = pneg %p72
        %p410 = pneg %p96
        %p411 = pneg %p93
        %p412 = scmp.lt.s32.totalorder %s30, 1
        %s413 = scalar_select %p412, %s30, 1
        %p414 = scmp.lt.s32.totalorder %s31, 0
        %s415 = scalar_select %p414, %s31, 0
        %s416 = sadd.s32 %s415, %s413
        %s417 = smul.addr %s416, 4
        %s418 = scalar_lea.vmem %s3, %s417
        %p419 = pneg %p124
        %p420 = pneg %p121
        %p421 = scmp.lt.s32.totalorder %s30, 1
        %s422 = scalar_select %p421, %s30, 1
        %p423 = scmp.lt.s32.totalorder %s31, 0
        %s424 = scalar_select %p423, %s31, 0
        %s425 = sadd.s32 %s424, %s422
        %s426 = smul.addr %s425, 4
        %s427 = scalar_lea.vmem %s4, %s426
        %p428 = pneg %p152
        %p429 = pneg %p149
        %p430 = scmp.lt.s32.totalorder %s30, 1
        %s431 = scalar_select %p430, %s30, 1
        %p432 = scmp.lt.s32.totalorder %s31, 0
        %s433 = scalar_select %p432, %s31, 0
        %s434 = sadd.s32 %s433, %s431
        %s435 = smul.addr %s434, 4
        %s436 = scalar_lea.vmem %s5, %s435
        %p437 = pneg %p180
        %p438 = pneg %p177
        %p439 = pneg %p201
        %p440 = pneg %p198
        %p441 = pneg %p222
        %p442 = pneg %p219
        %p443 = pneg %p243
        %p444 = pneg %p240
        %p445 = pneg %p264
        %p446 = pneg %p261
        %p447 = pneg %p292
        %p448 = pneg %p289
        %s449 = sand.u32 %s279, 1
        %s450 = scalar_lea.sflag [#allocation3], %s449
        %s451 = sand.u32 %s279, 1
        %s452 = smul.addr %s451, 8
        %s453 = scalar_lea.vmem [#allocation8], %s452
        %p454 = scmp.lt.s32.totalorder %s30, 1
        %s455 = scalar_select %p454, %s30, 1
        %p456 = scmp.lt.s32.totalorder %s31, 0
        %s457 = scalar_select %p456, %s31, 0
        %s458 = sadd.s32 %s457, %s455
        %s459 = smul.addr %s458, 4
        %s460 = scalar_lea.vmem %s3, %s459
        %p461 = scmp.lt.s32.totalorder %s30, 1
        %s462 = scalar_select %p461, %s30, 1
        %p463 = scmp.lt.s32.totalorder %s31, 0
        %s464 = scalar_select %p463, %s31, 0
        %s465 = sadd.s32 %s464, %s462
        %s466 = smul.addr %s465, 4
        %s467 = scalar_lea.vmem %s4, %s466
        %p468 = scmp.lt.s32.totalorder %s30, 1
        %s469 = scalar_select %p468, %s30, 1
        %p470 = scmp.lt.s32.totalorder %s31, 0
        %s471 = scalar_select %p470, %s31, 0
        %s472 = sadd.s32 %s471, %s469
        %s473 = smul.addr %s472, 4
        %s474 = scalar_lea.vmem %s5, %s473
        %s475 = sld [smem:[#allocation2 + %s30]]
        %s476 = sld [smem:[#allocation5 + %s30]]
        %s477 = sld [smem:[#allocation7 + %s30]]
        %v478 = vld [vmem:[%s460] sm:$0xf]
        %v479 = vunpack.c.l.bf16 %v478
        %v480 = vstv %s475
        %v481 = vmul.f32 %v480, %v479
        %v482 = vld [vmem:[%s467] sm:$0xf]
        %v483 = vunpack.c.l.bf16 %v482
        %v484 = vstv %s476
        %v485 = vmul.f32 %v484, %v483
        %v486 = vadd.f32 %v481, %v485
        %v487 = vpack.c.bf16 %v486, %v486
        %v488 = vld [vmem:[%s6] sm:$0xf]
        %v489 = vld [vmem:[%s6 + $0x4] sm:$0xf]
        %v490 = vld [vmem:[%s6 + $0x8] sm:$0xf]
        %v491 = vld [vmem:[%s6 + $0xc] sm:$0xf]
        %v492 = vld [vmem:[%s6 + $0x10] sm:$0xf]
        %v493 = vld [vmem:[%s6 + $0x14] sm:$0xf]
        %v494 = vld [vmem:[%s6 + $0x18] sm:$0xf]
        %v495 = vld [vmem:[%s6 + $0x1c] sm:$0xf]
        %v496 = vld [vmem:[%s6 + $0x20] sm:$0xf]
        %v497 = vld [vmem:[%s6 + $0x24] sm:$0xf]
        %v498 = vld [vmem:[%s6 + $0x28] sm:$0xf]
        %v499 = vld [vmem:[%s6 + $0x2c] sm:$0xf]
        %v500 = vld [vmem:[%s6 + $0x30] sm:$0xf]
        %v501 = vld [vmem:[%s6 + $0x34] sm:$0xf]
        %v502 = vld [vmem:[%s6 + $0x38] sm:$0xf]
        %v503 = vld [vmem:[%s6 + $0x3c] sm:$0xf]
        %v504 = vld [vmem:[%s474] sm:$0xf]
        %v505 = vld [vmem:[%s7] sm:$0xf]
        %v506 = vld [vmem:[%s7 + $0x4] sm:$0xf]
        %v507 = vld [vmem:[%s7 + $0x8] sm:$0xf]
        %v508 = vld [vmem:[%s7 + $0xc] sm:$0xf]
        %v509 = vld [vmem:[%s7 + $0x10] sm:$0xf]
        %v510 = vld [vmem:[%s7 + $0x14] sm:$0xf]
        %v511 = vld [vmem:[%s7 + $0x18] sm:$0xf]
        %v512 = vld [vmem:[%s7 + $0x1c] sm:$0xf]
        %v513 = vld [vmem:[%s7 + $0x20] sm:$0xf]
        %v514 = vld [vmem:[%s7 + $0x24] sm:$0xf]
        %v515 = vld [vmem:[%s7 + $0x28] sm:$0xf]
        %v516 = vld [vmem:[%s7 + $0x2c] sm:$0xf]
        %v517 = vld [vmem:[%s7 + $0x30] sm:$0xf]
        %v518 = vld [vmem:[%s7 + $0x34] sm:$0xf]
        %v519 = vld [vmem:[%s7 + $0x38] sm:$0xf]
        %v520 = vld [vmem:[%s7 + $0x3c] sm:$0xf]
        %v537 = vunpack.c.l.b16 %v505
        %v538 = vunpack.c.l.b16 %v506
        %v539 = vunpack.c.l.b16 %v507
        %v540 = vunpack.c.l.b16 %v508
        %v541 = vunpack.c.l.b16 %v509
        %v542 = vunpack.c.l.b16 %v510
        %v543 = vunpack.c.l.b16 %v511
        %v544 = vunpack.c.l.b16 %v512
        %v545 = vunpack.c.l.b16 %v513
        %v546 = vunpack.c.l.b16 %v514
        %v547 = vunpack.c.l.b16 %v515
        %v548 = vunpack.c.l.b16 %v516
        %v549 = vunpack.c.l.b16 %v517
        %v550 = vunpack.c.l.b16 %v518
        %v551 = vunpack.c.l.b16 %v519
        %v552 = vunpack.c.l.b16 %v520
        %v553 = vpack.c.b16 %v538, %v537
        %v554 = vpack.c.b16 %v540, %v539
        %v555 = vpack.c.b16 %v542, %v541
        %v556 = vpack.c.b16 %v544, %v543
        %v557 = vpack.c.b16 %v546, %v545
        %v558 = vpack.c.b16 %v548, %v547
        %v559 = vpack.c.b16 %v550, %v549
        %v560 = vpack.c.b16 %v552, %v551
        %569 = vmatpush.bf16.msra.mxu0 %v560
        %570 = vmatpush.bf16.msra.mxu0 %v559
        %571 = vmatpush.bf16.msra.mxu0 %v558
        %572 = vmatpush.bf16.msra.mxu0 %v557
        %573 = vmatpush.bf16.msra.mxu0 %v556
        %574 = vmatpush.bf16.msra.mxu0 %v555
        %575 = vmatpush.bf16.msra.mxu0 %v554
        %576 = vmatpush.bf16.msra.mxu0 %v553
        %577 = vmatmul.bf16.gmra.mxu0 %v504
        %v578 = vpop.f32.mrf.mxu0
        %v579 = vadd.f32 0.0, %v578
        %v580 = vpop.f32.mrf.mxu0
        %581 = vdwg.mxu0
        %v598 = vunpack.c.l.b16 %v488
        %v599 = vunpack.c.l.b16 %v489
        %v600 = vunpack.c.l.b16 %v490
        %v601 = vunpack.c.l.b16 %v491
        %v602 = vunpack.c.l.b16 %v492
        %v603 = vunpack.c.l.b16 %v493
        %v604 = vunpack.c.l.b16 %v494
        %v605 = vunpack.c.l.b16 %v495
        %v606 = vunpack.c.l.b16 %v496
        %v607 = vunpack.c.l.b16 %v497
        %v608 = vunpack.c.l.b16 %v498
        %v609 = vunpack.c.l.b16 %v499
        %v610 = vunpack.c.l.b16 %v500
        %v611 = vunpack.c.l.b16 %v501
        %v612 = vunpack.c.l.b16 %v502
        %v613 = vunpack.c.l.b16 %v503
        %v614 = vpack.c.b16 %v599, %v598
        %v615 = vpack.c.b16 %v601, %v600
        %v616 = vpack.c.b16 %v603, %v602
        %v617 = vpack.c.b16 %v605, %v604
        %v618 = vpack.c.b16 %v607, %v606
        %v619 = vpack.c.b16 %v609, %v608
        %v620 = vpack.c.b16 %v611, %v610
        %v621 = vpack.c.b16 %v613, %v612
        %630 = vmatpush.bf16.msra.mxu0 %v621
        %631 = vmatpush.bf16.msra.mxu0 %v620
        %632 = vmatpush.bf16.msra.mxu0 %v619
        %633 = vmatpush.bf16.msra.mxu0 %v618
        %634 = vmatpush.bf16.msra.mxu0 %v617
        %635 = vmatpush.bf16.msra.mxu0 %v616
        %636 = vmatpush.bf16.msra.mxu0 %v615
        %637 = vmatpush.bf16.msra.mxu0 %v614
        %638 = vmatmul.bf16.gmra.mxu0 %v487
        %v639 = vpop.f32.mrf.mxu0
        %v640 = vadd.f32 %v579, %v639
        %v641 = vpop.f32.mrf.mxu0
        %642 = vdwg.mxu0
        %v643 = vld [vmem:[%s8] sm:$0x1]
        %v645 = vperm.slane %v643, 0
        %v647 = vadd.f32 %v640, %v645
        %v648 = vld [vmem:[%s9] sm:$0x1]
        %v649 = vstv %s477
        %v650 = vmul.f32 %v649, %v648
        %v652 = vperm.slane %v650, 0
        %v654 = vadd.f32 %v647, %v652
        %655 = vst [vmem:[%s453] sm:$0xff] %v654
        %s656 = sand.u32 %s279, 1
        %s657 = scalar_lea.sflag [#allocation3], %s656
        %s658 = sand.u32 %s279, 1
        %s659 = smul.addr %s658, 8
        %s660 = scalar_lea.vmem [#allocation8], %s659
        // Predicated region
        $region73: #{branch_1_fun.3} parent=59 // pred_check
          %p661 = pneg %p289
        $region74: #{branch_1_fun.3} parent=59 // pred_check_branch
          %663 = sbr.rel (%p661) target = $region76
        $region75: #{branch_1_fun.3} parent=59 // pred_region
          %665 = vsyncadd %s657, 0
          %s666 = sadd.s32 %s31, %s30
          %s667 = smul.addr %s666, 8
          %s668 = scalar_lea.hbm %s10, %s667
          %s670 = sshll.u32 %s660, 4
          %s671 = int_to_ptr.vmem [resolvable:$true] %s670
          %s672 = sshll.u32 %s668, 4
          %s673 = int_to_ptr.hbm [resolvable:$true] %s672
          %675 = dma.vmem_to_hbm [thread:$0]  %s671, 128, %s673, %s657
        $region76: #{branch_1_fun.3} parent=59 // pred_fallthru
          _
      $region60: #{branch_1_fun.3} parent=5 // pred_fallthru
        _
      %p676 = scmp.le.s32.totalorder 2, %s21
      // Predicated region
      $region77: #{branch_1_fun.3} parent=5 // pred_check
        %p677 = pneg %p676
      $region78: #{branch_1_fun.3} parent=5 // pred_check_branch
        %679 = sbr.rel (%p677) target = $region80
      $region79: #{branch_1_fun.3} parent=5 // pred_region
        %s680 = ssub.s32 %s21, 2
        // Predicated region
        $region81: #{branch_1_fun.3} parent=79 // pred_check
          %p681 = pneg %p295
        $region82: #{branch_1_fun.3} parent=79 // pred_check_branch
          %683 = sbr.rel (%p681) target = $region84
        $region83: #{branch_1_fun.3} parent=79 // pred_region
          %s684 = sand.u32 %s280, 1
          %s685 = scalar_lea.sflag [#allocation3], %s684
          %s686 = sand.u32 %s280, 1
          %s687 = smul.addr %s686, 8
          %s688 = scalar_lea.vmem [#allocation8], %s687
          %690 = dma.done %s685, 128
        $region84: #{branch_1_fun.3} parent=79 // pred_fallthru
          _
      $region80: #{branch_1_fun.3} parent=5 // pred_fallthru
        _
    $region6: #{branch_1_fun.3} parent=1 // loop_footer
      %s25 = sadd.s32 1, %s21
    $region7: #{branch_1_fun.3} parent=1 // loop_footer_branch
      %20 = sbr.rel target = $region3
    $region8: #{branch_1_fun.3} parent=1 // loop_exit
      _
    %691 = vsyncpa [#allocation3], 1
    %s692 = scalar_lea.sflag [#allocation3], 1
    %693 = vsyncpa %s692, 1
    %694 = vsyncpa [#allocation4], 1
    %s695 = scalar_lea.sflag [#allocation4], 1
    %696 = vsyncpa %s695, 1
    %697 = vsyncpa [#allocation6], 1

// kernel: text_sed_forward.3
$region0: #{text_sed_forward.3}
  #allocation0 [shape = 'u32[]', space=smem, size = 0x4, offset = 0x4, fixed_abs, tag = 'smem constant byte address 0x4 - core index']
  #allocation1 [shape = 'u32[72,128]{1,0:T(1,128)}', space=vmem, size = 0x9000, scoped, tag = 'internal scratch']
  #allocation2 [shape = 'f32[8,1]{1,0:T(8,128)}', space=vmem, size = 0x1000, scoped, tag = 'scratch operand']
  #allocation3 [shape = 'f32[8,1]{1,0:T(8,128)}', space=vmem, size = 0x1000, scoped, tag = 'scratch operand']
  %s0 = inlined_call_operand.vmem [shape: bf16[16,128], index: 0, kind: input, shape index: {}]
  %s1 = inlined_call_operand.vmem [shape: bf16[128,384], index: 1, kind: input, shape index: {}]
  %s2 = inlined_call_operand.vmem [shape: f32[16,1], index: 2, kind: output, shape index: {}]
  %s3 = sld [smem:[#allocation0]]
  $region90: #{text_sed_forward.3} parent=0
    _
  %s5 = ssub.s32 1, %s3
  %s6 = scalar_select 0, %s5, %s3
  $region1: #{text_sed_forward.3} parent=0
    #allocation4 [shape = 'u8[65536]{0}', space=vmem, size = 0x10000, scoped, tag = 'input window, operand 1']
    loop: start=0, step=1, limit=8
    $region2: #{text_sed_forward.3} parent=1 // loop_pre_header
      _
    $region3: #{text_sed_forward.3} parent=1 // loop_header
      %s8 = sphi 0, %s12
      %p9 = scmp.ge.s32.totalorder %s8, 8
      %s15 = sphi 0, %s27
      %s16 = sphi 0, %s23
      %s17 = sphi 0, %s15
      %s18 = sphi 0, %s16
      %s19 = sphi 0, %s17
      %s20 = sphi 0, %s18
      %s30 = sphi 0, %s32
      %s33 = sphi 0, %s30
      %s34 = sphi 0, %s33
      %s50 = sphi 0, %s34
      %s56 = sphi 0, %s58
      %s59 = sphi 0, %s56
      %s60 = sphi 0, %s59
      %s76 = sphi 0, %s60
      %s82 = sphi 0, %s84
      %s85 = sphi 0, %s82
      %s86 = sphi 0, %s85
      %s102 = sphi 0, %s86
    $region4: #{text_sed_forward.3} parent=1 // loop_header_branch
      %11 = sbr.rel (%p9) target = $region8
    $region5: #{text_sed_forward.3} parent=1 // loop_body
      %s13 = ssub.s32 %s8, 1
      %s14 = ssub.s32 %s8, 2
      %s21 = sadd.s32 1, %s16
      %p22 = scmp.ge.s32.totalorder %s21, 3
      %s23 = scalar_select %p22, 0, %s21
      %s24 = sadd.s32 1, %s15
      %s25 = scalar_select %p22, %s24, %s15
      %p26 = scmp.ge.s32.totalorder %s25, 2
      %s27 = scalar_select %p26, 0, %s25
      %s28 = ssub.s32 %s15, %s27
      %p29 = scmp.eq.s32.totalorder %s28, 0
      %s31 = sadd.s32 %s30, 1
      %s32 = scalar_select %p29, %s30, %s31
      %p35 = pneg %p29
      %p36 = scmp.eq.s32.totalorder %s8, 5
      %p37 = por %p35, %p36
      %p38 = scmp.ne.s32.totalorder %s30, %s33
      %p39 = scmp.eq.s32.totalorder %s8, 0
      %p40 = por %p38, %p39
      %p41 = scmp.ne.s32.totalorder %s30, %s33
      %p42 = scmp.eq.s32.totalorder %s13, 5
      %p43 = por %p41, %p42
      %p44 = scmp.ne.s32.totalorder %s33, %s34
      %p45 = scmp.eq.s32.totalorder %s13, 0
      %p46 = por %p44, %p45
      %p47 = scmp.ne.s32.totalorder %s33, %s34
      %p48 = scmp.eq.s32.totalorder %s14, 5
      %p49 = por %p47, %p48
      %p51 = scmp.ne.s32.totalorder %s34, %s50
      %p52 = scmp.eq.s32.totalorder %s14, 0
      %p53 = por %p51, %p52
      %s54 = ssub.s32 %s16, %s23
      %p55 = scmp.eq.s32.totalorder %s54, 0
      %s57 = sadd.s32 %s56, 1
      %s58 = scalar_select %p55, %s56, %s57
      %p61 = pneg %p55
      %p62 = scmp.eq.s32.totalorder %s8, 5
      %p63 = por %p61, %p62
      %p64 = scmp.ne.s32.totalorder %s56, %s59
      %p65 = scmp.eq.s32.totalorder %s8, 0
      %p66 = por %p64, %p65
      %p67 = scmp.ne.s32.totalorder %s56, %s59
      %p68 = scmp.eq.s32.totalorder %s13, 5
      %p69 = por %p67, %p68
      %p70 = scmp.ne.s32.totalorder %s59, %s60
      %p71 = scmp.eq.s32.totalorder %s13, 0
      %p72 = por %p70, %p71
      %p73 = scmp.ne.s32.totalorder %s59, %s60
      %p74 = scmp.eq.s32.totalorder %s14, 5
      %p75 = por %p73, %p74
      %p77 = scmp.ne.s32.totalorder %s60, %s76
      %p78 = scmp.eq.s32.totalorder %s14, 0
      %p79 = por %p77, %p78
      %s80 = ssub.s32 %s15, %s27
      %p81 = scmp.eq.s32.totalorder %s80, 0
      %s83 = sadd.s32 %s82, 1
      %s84 = scalar_select %p81, %s82, %s83
      %p87 = pneg %p81
      %p88 = scmp.eq.s32.totalorder %s8, 5
      %p89 = por %p87, %p88
      %p90 = scmp.ne.s32.totalorder %s82, %s85
      %p91 = scmp.eq.s32.totalorder %s8, 0
      %p92 = por %p90, %p91
      %p93 = scmp.ne.s32.totalorder %s82, %s85
      %p94 = scmp.eq.s32.totalorder %s13, 5
      %p95 = por %p93, %p94
      %p96 = scmp.ne.s32.totalorder %s85, %s86
      %p97 = scmp.eq.s32.totalorder %s13, 0
      %p98 = por %p96, %p97
      %p99 = scmp.ne.s32.totalorder %s85, %s86
      %p100 = scmp.eq.s32.totalorder %s14, 5
      %p101 = por %p99, %p100
      %p103 = scmp.ne.s32.totalorder %s86, %s102
      %p104 = scmp.eq.s32.totalorder %s14, 0
      %p105 = por %p103, %p104
      %p106 = scmp.le.s32.totalorder 1, %s8
      %p107 = scmp.lt.s32.totalorder %s8, 7
      %p108 = pnand %p106, %p107
      %p109 = pneg %p108
      // Predicated region
      $region9: #{text_sed_forward.3} parent=5 // pred_check
        _
      $region10: #{text_sed_forward.3} parent=5 // pred_check_branch
        %111 = sbr.rel (%p108) target = $region12
      $region11: #{text_sed_forward.3} parent=5 // pred_region
        %s112 = ssub.s32 %s8, 1
      $region12: #{text_sed_forward.3} parent=5 // pred_fallthru
        _
      %p113 = scmp.lt.s32.totalorder %s8, 6
      // Predicated region
      $region13: #{text_sed_forward.3} parent=5 // pred_check
        %p114 = pneg %p113
      $region14: #{text_sed_forward.3} parent=5 // pred_check_branch
        %116 = sbr.rel (%p114) target = $region16
      $region15: #{text_sed_forward.3} parent=5 // pred_region
        // Predicated region
        $region17: #{text_sed_forward.3} parent=15 // pred_check
          %p117 = pneg %p40
        $region18: #{text_sed_forward.3} parent=15 // pred_check_branch
          %119 = sbr.rel (%p117) target = $region20
        $region19: #{text_sed_forward.3} parent=15 // pred_region
          %p120 = scmp.lt.s32.totalorder %s15, 1
          %s121 = scalar_select %p120, %s15, 1
          %s122 = smul.addr %s121, 4
          %s123 = scalar_lea.vmem %s0, %s122
        $region20: #{text_sed_forward.3} parent=15 // pred_fallthru
          _
        // Predicated region
        $region21: #{text_sed_forward.3} parent=15 // pred_check
          %p124 = pneg %p66
        $region22: #{text_sed_forward.3} parent=15 // pred_check_branch
          %126 = sbr.rel (%p124) target = $region24
        $region23: #{text_sed_forward.3} parent=15 // pred_region
          %s127 = sand.u32 %s56, 1
          %s128 = sand.u32 %s56, 1
          %s129 = smul.addr %s128, 64
          %s130 = scalar_lea.vmem [#allocation4], %s129
          %s131 = smul.addr %s16, 4
          %s132 = scalar_lea.vmem %s1, %s131
          // Predicated region
          $region25: #{text_sed_forward.3} parent=23 // pred_check
            _
          $region26: #{text_sed_forward.3} parent=23 // pred_check_branch
            %134 = sbr.rel (0) target = $region28
          $region27: #{text_sed_forward.3} parent=23 // pred_region
            // Predicated region
            $region29: #{text_sed_forward.3} parent=27 // pred_check
              _
            $region30: #{text_sed_forward.3} parent=27 // pred_check_branch
              %136 = sbr.rel target = $region32
            $region31: #{text_sed_forward.3} parent=27 // pred_region
              // Predicated region
              $region44: #{text_sed_forward.3} parent=31 // pred_check
                _
              $region45: #{text_sed_forward.3} parent=31 // pred_check_branch
                %182 = sbr.rel (0) target = $region47
              $region46: #{text_sed_forward.3} parent=31 // pred_region
                loop: start=0, step=1, limit=1
                $region48: #{text_sed_forward.3} parent=46 // loop_pre_header
                  _
                $region49: #{text_sed_forward.3} parent=46 // loop_header
                  %s184 = sphi 0, %s188
                  %p185 = scmp.ge.s32.totalorder %s184, 1
                  %s189 = sphi %s132, %s132
                  %s190 = sphi %s130, %s130
                $region50: #{text_sed_forward.3} parent=46 // loop_header_branch
                  %187 = sbr.rel (%p185) target = $region54
                $region51: #{text_sed_forward.3} parent=46 // loop_body
                  _
                $region52: #{text_sed_forward.3} parent=46 // loop_footer
                  %s188 = sadd.s32 1, %s184
                $region53: #{text_sed_forward.3} parent=46 // loop_footer_branch
                  %183 = sbr.rel target = $region49
                $region54: #{text_sed_forward.3} parent=46 // loop_exit
                  _
                %s192 = ssub.s32 16, 1
                loop: start=0, step=1, limit=1
                $region55: #{text_sed_forward.3} parent=46 // loop_pre_header
                  _
                $region56: #{text_sed_forward.3} parent=46 // loop_header
                  %s194 = sphi 0, %s198
                  %p195 = scmp.ge.s32.totalorder %s194, 1
                  %s199 = sphi %s132, %s132
                  %s200 = sphi %s130, %s130
                $region57: #{text_sed_forward.3} parent=46 // loop_header_branch
                  %197 = sbr.rel (%p195) target = $region61
                $region58: #{text_sed_forward.3} parent=46 // loop_body
                  %v201 = vld [vmem:[%s199] sm:%s192]
                  %202 = vst [vmem:[%s200] sm:%s192] %v201
                  %v203 = vld [vmem:[%s199 + $0xc] sm:%s192]
                  %204 = vst [vmem:[%s200 + $0x4] sm:%s192] %v203
                  %v205 = vld [vmem:[%s199 + $0x18] sm:%s192]
                  %206 = vst [vmem:[%s200 + $0x8] sm:%s192] %v205
                  %v207 = vld [vmem:[%s199 + $0x24] sm:%s192]
                  %208 = vst [vmem:[%s200 + $0xc] sm:%s192] %v207
                  %v209 = vld [vmem:[%s199 + $0x30] sm:%s192]
                  %210 = vst [vmem:[%s200 + $0x10] sm:%s192] %v209
                  %v211 = vld [vmem:[%s199 + $0x3c] sm:%s192]
                  %212 = vst [vmem:[%s200 + $0x14] sm:%s192] %v211
                  %v213 = vld [vmem:[%s199 + $0x48] sm:%s192]
                  %214 = vst [vmem:[%s200 + $0x18] sm:%s192] %v213
                  %v215 = vld [vmem:[%s199 + $0x54] sm:%s192]
                  %216 = vst [vmem:[%s200 + $0x1c] sm:%s192] %v215
                  %v217 = vld [vmem:[%s199 + $0x60] sm:%s192]
                  %218 = vst [vmem:[%s200 + $0x20] sm:%s192] %v217
                  %v219 = vld [vmem:[%s199 + $0x6c] sm:%s192]
                  %220 = vst [vmem:[%s200 + $0x24] sm:%s192] %v219
                  %v221 = vld [vmem:[%s199 + $0x78] sm:%s192]
                  %222 = vst [vmem:[%s200 + $0x28] sm:%s192] %v221
                  %v223 = vld [vmem:[%s199 + $0x84] sm:%s192]
                  %224 = vst [vmem:[%s200 + $0x2c] sm:%s192] %v223
                  %v225 = vld [vmem:[%s199 + $0x90] sm:%s192]
                  %226 = vst [vmem:[%s200 + $0x30] sm:%s192] %v225
                  %v227 = vld [vmem:[%s199 + $0x9c] sm:%s192]
                  %228 = vst [vmem:[%s200 + $0x34] sm:%s192] %v227
                  %v229 = vld [vmem:[%s199 + $0xa8] sm:%s192]
                  %230 = vst [vmem:[%s200 + $0x38] sm:%s192] %v229
                  %v231 = vld [vmem:[%s199 + $0xb4] sm:%s192]
                  %232 = vst [vmem:[%s200 + $0x3c] sm:%s192] %v231
                $region59: #{text_sed_forward.3} parent=46 // loop_footer
                  %s198 = sadd.s32 1, %s194
                $region60: #{text_sed_forward.3} parent=46 // loop_footer_branch
                  %193 = sbr.rel target = $region56
                $region61: #{text_sed_forward.3} parent=46 // loop_exit
                  _
              $region47: #{text_sed_forward.3} parent=31 // pred_fallthru
                _
            $region32: #{text_sed_forward.3} parent=27 // pred_fallthru
              _
            // Predicated region
            $region33: #{text_sed_forward.3} parent=27 // pred_check
              _
            $region34: #{text_sed_forward.3} parent=27 // pred_check_branch
              %138 = sbr.rel (0) target = $region36
            $region35: #{text_sed_forward.3} parent=27 // pred_region
              %s140 = ssub.s32 16, 1
              loop: start=0, step=1, limit=1
              $region37: #{text_sed_forward.3} parent=35 // loop_pre_header
                _
              $region38: #{text_sed_forward.3} parent=35 // loop_header
                %s142 = sphi 0, %s146
                %p143 = scmp.ge.s32.totalorder %s142, 1
                %s147 = sphi %s132, %s132
                %s148 = sphi %s130, %s130
              $region39: #{text_sed_forward.3} parent=35 // loop_header_branch
                %145 = sbr.rel (%p143) target = $region43
              $region40: #{text_sed_forward.3} parent=35 // loop_body
                %v149 = vld [vmem:[%s147] sm:%s140]
                %150 = vst [vmem:[%s148] sm:%s140] %v149
                %v151 = vld [vmem:[%s147 + $0xc] sm:%s140]
                %152 = vst [vmem:[%s148 + $0x4] sm:%s140] %v151
                %v153 = vld [vmem:[%s147 + $0x18] sm:%s140]
                %154 = vst [vmem:[%s148 + $0x8] sm:%s140] %v153
                %v155 = vld [vmem:[%s147 + $0x24] sm:%s140]
                %156 = vst [vmem:[%s148 + $0xc] sm:%s140] %v155
                %v157 = vld [vmem:[%s147 + $0x30] sm:%s140]
                %158 = vst [vmem:[%s148 + $0x10] sm:%s140] %v157
                %v159 = vld [vmem:[%s147 + $0x3c] sm:%s140]
                %160 = vst [vmem:[%s148 + $0x14] sm:%s140] %v159
                %v161 = vld [vmem:[%s147 + $0x48] sm:%s140]
                %162 = vst [vmem:[%s148 + $0x18] sm:%s140] %v161
                %v163 = vld [vmem:[%s147 + $0x54] sm:%s140]
                %164 = vst [vmem:[%s148 + $0x1c] sm:%s140] %v163
                %v165 = vld [vmem:[%s147 + $0x60] sm:%s140]
                %166 = vst [vmem:[%s148 + $0x20] sm:%s140] %v165
                %v167 = vld [vmem:[%s147 + $0x6c] sm:%s140]
                %168 = vst [vmem:[%s148 + $0x24] sm:%s140] %v167
                %v169 = vld [vmem:[%s147 + $0x78] sm:%s140]
                %170 = vst [vmem:[%s148 + $0x28] sm:%s140] %v169
                %v171 = vld [vmem:[%s147 + $0x84] sm:%s140]
                %172 = vst [vmem:[%s148 + $0x2c] sm:%s140] %v171
                %v173 = vld [vmem:[%s147 + $0x90] sm:%s140]
                %174 = vst [vmem:[%s148 + $0x30] sm:%s140] %v173
                %v175 = vld [vmem:[%s147 + $0x9c] sm:%s140]
                %176 = vst [vmem:[%s148 + $0x34] sm:%s140] %v175
                %v177 = vld [vmem:[%s147 + $0xa8] sm:%s140]
                %178 = vst [vmem:[%s148 + $0x38] sm:%s140] %v177
                %v179 = vld [vmem:[%s147 + $0xb4] sm:%s140]
                %180 = vst [vmem:[%s148 + $0x3c] sm:%s140] %v179
              $region41: #{text_sed_forward.3} parent=35 // loop_footer
                %s146 = sadd.s32 1, %s142
              $region42: #{text_sed_forward.3} parent=35 // loop_footer_branch
                %141 = sbr.rel target = $region38
              $region43: #{text_sed_forward.3} parent=35 // loop_exit
                _
            $region36: #{text_sed_forward.3} parent=27 // pred_fallthru
              _
          $region28: #{text_sed_forward.3} parent=23 // pred_fallthru
            _
          %233 = vnop
        $region24: #{text_sed_forward.3} parent=15 // pred_fallthru
          _
      $region16: #{text_sed_forward.3} parent=5 // pred_fallthru
        _
      %p234 = scmp.le.s32.totalorder 1, %s8
      %p235 = scmp.lt.s32.totalorder %s8, 7
      %p236 = pnand %p234, %p235
      %p237 = pneg %p236
      // Predicated region
      $region62: #{text_sed_forward.3} parent=5 // pred_check
        _
      $region63: #{text_sed_forward.3} parent=5 // pred_check_branch
        %239 = sbr.rel (%p236) target = $region65
      $region64: #{text_sed_forward.3} parent=5 // pred_region
        %s240 = ssub.s32 %s8, 1
        %s241 = sand.u32 %s59, 1
        %s242 = sand.u32 %s59, 1
        %s243 = smul.addr %s242, 64
        %s244 = scalar_lea.vmem [#allocation4], %s243
        // Predicated region
        $region66: #{text_sed_forward.3} parent=64 // pred_check
          %p245 = pneg %p72
        $region67: #{text_sed_forward.3} parent=64 // pred_check_branch
          %247 = sbr.rel (%p245) target = $region69
        $region68: #{text_sed_forward.3} parent=64 // pred_region
          _
        $region69: #{text_sed_forward.3} parent=64 // pred_fallthru
          _
        %p248 = scmp.lt.s32.totalorder %s17, 1
        %s249 = scalar_select %p248, %s17, 1
        %s250 = smul.addr %s249, 4
        %s251 = scalar_lea.vmem %s0, %s250
        %p252 = pneg %p46
        %p253 = pneg %p43
        %s254 = sand.u32 %s59, 1
        %s255 = sand.u32 %s59, 1
        %s256 = smul.addr %s255, 64
        %s257 = scalar_lea.vmem [#allocation4], %s256
        %p258 = pneg %p72
        %p259 = pneg %p69
        %p260 = pneg %p98
        %p261 = pneg %p95
        %p262 = scmp.lt.s32.totalorder %s17, 1
        %s263 = scalar_select %p262, %s17, 1
        %s264 = smul.addr %s263, 8
        %s265 = scalar_lea.vmem %s2, %s264
        %p266 = scmp.lt.s32.totalorder %s17, 1
        %s267 = scalar_select %p266, %s17, 1
        %s268 = smul.addr %s267, 4
        %s269 = scalar_lea.vmem %s0, %s268
        %p270 = scmp.lt.s32.totalorder %s17, 1
        %s271 = scalar_select %p270, %s17, 1
        %s272 = smul.addr %s271, 8
        %s273 = scalar_lea.vmem %s2, %s272
        %p274 = scmp.eq.s32.totalorder %s18, 0
        // Predicated region
        $region70: #{text_sed_forward.3} parent=64 // pred_check
          %p275 = pneg %p274
        $region71: #{text_sed_forward.3} parent=64 // pred_check_branch
          %277 = sbr.rel (%p275) target = $region73
        $region72: #{text_sed_forward.3} parent=64 // pred_region
          %vm278 = vcmask 7168
          %279 = vst.msk [vmem:[#allocation2] sm:$0xff] %vm278, -inf
          %280 = vst.msk [vmem:[#allocation3] sm:$0xff] %vm278, 0.0
        $region73: #{text_sed_forward.3} parent=64 // pred_fallthru
          _
        %v281 = vld [vmem:[%s269] sm:$0xf]
        %v282 = vld [vmem:[%s244] sm:$0xf]
        %v283 = vld [vmem:[%s244 + $0x4] sm:$0xf]
        %v284 = vld [vmem:[%s244 + $0x8] sm:$0xf]
        %v285 = vld [vmem:[%s244 + $0xc] sm:$0xf]
        %v286 = vld [vmem:[%s244 + $0x10] sm:$0xf]
        %v287 = vld [vmem:[%s244 + $0x14] sm:$0xf]
        %v288 = vld [vmem:[%s244 + $0x18] sm:$0xf]
        %v289 = vld [vmem:[%s244 + $0x1c] sm:$0xf]
        %v290 = vld [vmem:[%s244 + $0x20] sm:$0xf]
        %v291 = vld [vmem:[%s244 + $0x24] sm:$0xf]
        %v292 = vld [vmem:[%s244 + $0x28] sm:$0xf]
        %v293 = vld [vmem:[%s244 + $0x2c] sm:$0xf]
        %v294 = vld [vmem:[%s244 + $0x30] sm:$0xf]
        %v295 = vld [vmem:[%s244 + $0x34] sm:$0xf]
        %v296 = vld [vmem:[%s244 + $0x38] sm:$0xf]
        %v297 = vld [vmem:[%s244 + $0x3c] sm:$0xf]
        %v314 = vunpack.c.l.b16 %v282
        %v315 = vunpack.c.l.b16 %v283
        %v316 = vunpack.c.l.b16 %v284
        %v317 = vunpack.c.l.b16 %v285
        %v318 = vunpack.c.l.b16 %v286
        %v319 = vunpack.c.l.b16 %v287
        %v320 = vunpack.c.l.b16 %v288
        %v321 = vunpack.c.l.b16 %v289
        %v322 = vunpack.c.l.b16 %v290
        %v323 = vunpack.c.l.b16 %v291
        %v324 = vunpack.c.l.b16 %v292
        %v325 = vunpack.c.l.b16 %v293
        %v326 = vunpack.c.l.b16 %v294
        %v327 = vunpack.c.l.b16 %v295
        %v328 = vunpack.c.l.b16 %v296
        %v329 = vunpack.c.l.b16 %v297
        %v330 = vpack.c.b16 %v315, %v314
        %v331 = vpack.c.b16 %v317, %v316
        %v332 = vpack.c.b16 %v319, %v318
        %v333 = vpack.c.b16 %v321, %v320
        %v334 = vpack.c.b16 %v323, %v322
        %v335 = vpack.c.b16 %v325, %v324
        %v336 = vpack.c.b16 %v327, %v326
        %v337 = vpack.c.b16 %v329, %v328
        %346 = vmatpush.bf16.msra.mxu0 %v337
        %347 = vmatpush.bf16.msra.mxu0 %v336
        %348 = vmatpush.bf16.msra.mxu0 %v335
        %349 = vmatpush.bf16.msra.mxu0 %v334
        %350 = vmatpush.bf16.msra.mxu0 %v333
        %351 = vmatpush.bf16.msra.mxu0 %v332
        %352 = vmatpush.bf16.msra.mxu0 %v331
        %353 = vmatpush.bf16.msra.mxu0 %v330
        %354 = vmatmul.bf16.gmra.mxu0 %v281
        %v355 = vpop.f32.mrf.mxu0
        %v356 = vadd.f32 0.0, %v355
        %v357 = vpop.f32.mrf.mxu0
        %358 = vdwg.mxu0
        %v359 = vlaneseq
        %v360 = vand.u32 %v359, 127
        %s361 = smul.u32 %s18, 128
        %v362 = vstv %s361
        %v363 = vadd.s32 %v360, %v362
        %vm364 = vcmp.lt.s32.totalorder %v363, 320
        %v365 = vsel %vm364, %v356, -inf
        %v366 = vld [vmem:[#allocation2] sm:$0xff]
        %367 = vmax.xlane.f32.xlu0 %v365
        %v368 = vpop.xlane.xlu0 %367
        %v369 = vmax.f32 %v366, %v368
        %v370 = vsub.f32 %v366, %v369
        %v371 = vmul.f32 %v370, 1.442695
        %v372 = vpow.pop %v371
        %v373 = vld [vmem:[#allocation3] sm:$0xff]
        %v374 = vmul.f32 %v372, %v373
        %376 = vset.pattern.permute.xlu0 0
        %377 = vperm.xlu0 %376, %v369
        %v378 = vpop.permute.xlu0 %377
        %v380 = vsub.f32 %v365, %v378
        %v381 = vmul.f32 %v380, 1.442695
        %v382 = vpow.pop %v381
        %383 = vadd.xlane.f32.xlu0 %v382
        %v384 = vpop.xlane.xlu0 %383
        %v385 = vadd.f32 %v374, %v384
        %vm386 = vcmask 7168
        %387 = vst.msk [vmem:[#allocation3] sm:$0xff] %vm386, %v385
        %388 = vst.msk [vmem:[#allocation2] sm:$0xff] %vm386, %v369
        %p389 = scmp.eq.s32.totalorder %s18, 2
        // Predicated region
        $region74: #{text_sed_forward.3} parent=64 // pred_check
          %p390 = pneg %p389
        $region75: #{text_sed_forward.3} parent=64 // pred_check_branch
          %392 = sbr.rel (%p390) target = $region77
        $region76: #{text_sed_forward.3} parent=64 // pred_region
          %v393 = vld [vmem:[#allocation2] sm:$0xff]
          %v394 = vld [vmem:[#allocation3] sm:$0xff]
          %v395 = vlog2.pop %v394
          %v396 = vmul.f32 %v395, 0.6931472
          %v397 = vadd.f32 %v393, %v396
          %398 = vst.msk [vmem:[%s273] sm:$0xff] %vm386, %v397
        $region77: #{text_sed_forward.3} parent=64 // pred_fallthru
          _
        %p399 = scmp.lt.s32.totalorder %s17, 1
        %s400 = scalar_select %p399, %s17, 1
        %s401 = smul.addr %s400, 8
        %s402 = scalar_lea.vmem %s2, %s401
        // Predicated region
        $region78: #{text_sed_forward.3} parent=64 // pred_check
          %p403 = pneg %p95
        $region79: #{text_sed_forward.3} parent=64 // pred_check_branch
          %405 = sbr.rel (%p403) target = $region81
        $region80: #{text_sed_forward.3} parent=64 // pred_region
          _
        $region81: #{text_sed_forward.3} parent=64 // pred_fallthru
          _
      $region65: #{text_sed_forward.3} parent=5 // pred_fallthru
        _
      %p406 = scmp.le.s32.totalorder 2, %s8
      // Predicated region
      $region82: #{text_sed_forward.3} parent=5 // pred_check
        %p407 = pneg %p406
      $region83: #{text_sed_forward.3} parent=5 // pred_check_branch
        %409 = sbr.rel (%p407) target = $region85
      $region84: #{text_sed_forward.3} parent=5 // pred_region
        %s410 = ssub.s32 %s8, 2
        // Predicated region
        $region86: #{text_sed_forward.3} parent=84 // pred_check
          %p411 = pneg %p101
        $region87: #{text_sed_forward.3} parent=84 // pred_check_branch
          %413 = sbr.rel (%p411) target = $region89
        $region88: #{text_sed_forward.3} parent=84 // pred_region
          %p414 = scmp.lt.s32.totalorder %s19, 1
          %s415 = scalar_select %p414, %s19, 1
          %s416 = smul.addr %s415, 8
          %s417 = scalar_lea.vmem %s2, %s416
        $region89: #{text_sed_forward.3} parent=84 // pred_fallthru
          _
      $region85: #{text_sed_forward.3} parent=5 // pred_fallthru
        _
    $region6: #{text_sed_forward.3} parent=1 // loop_footer
      %s12 = sadd.s32 1, %s8
    $region7: #{text_sed_forward.3} parent=1 // loop_footer_branch
      %7 = sbr.rel target = $region3
    $region8: #{text_sed_forward.3} parent=1 // loop_exit
      _

</llo_original>
